<compile_context>
chip_gen: v5e
topology: v5e:2x2
jax: 0.10.0
libtpu: 0.0.40
codegen_flags: <defaults>
</compile_context>

<pallas_src>
import jax
import jax.numpy as jnp
from jax import lax
from jax.experimental import pallas as pl
from jax.experimental.pallas import tpu as pltpu

EPS = 1e-5
NEG_SLOPE = 0.2


def _vmem_limit_bytes():
    """~3/4 of physical VMEM, capped at 100 MiB (48 MiB fallback)."""
    try:
        cap = getattr(pltpu.get_tpu_info(), "vmem_capacity_bytes", None)
        if cap:
            return max(32 * 1024 * 1024, min(int(cap) * 3 // 4, 100 * 1024 * 1024))
    except Exception:
        pass
    return 48 * 1024 * 1024


def _choose_channel_tile(cin):
    """Contraction (input-channel) tile: full Cin if small, else a 128-multiple."""
    if cin <= 512:
        return cin, cin
    for tk in (512, 384, 256, 128):
        if cin % tk == 0:
            return tk, cin
    return 128, ((cin + 127) // 128) * 128          # zero-pad channels (< 128 extra)


def _phase_tap_weight(weight, cinp):
    """weight (Cin, Cout, 4, 4) [ConvTranspose2d layout] -> (4, 4, Cout, cinp) bf16.

    Entry [2*ph+pw, 2*dh+dw] is the (Cout, Cin) matrix multiplying padded-input
    pixel (h+ph+dh, w+pw+dw) for output-parity phase (ph, pw) at output (2h+ph, 2w+pw).
    """
    cin = weight.shape[0]
    w = weight.astype(jnp.bfloat16)
    phases = []
    for ph in range(2):
        for pw in range(2):
            taps = []
            for dh in range(2):
                for dw in range(2):
                    taps.append(w[:, :, 3 - (2 * dh + ph), 3 - (2 * dw + pw)].T)  # (Cout, Cin)
            phases.append(jnp.stack(taps, axis=0))            # (4, Cout, Cin)
    wm = jnp.stack(phases, axis=0)                            # (4, 4, Cout, Cin)
    if cinp > cin:
        wm = jnp.pad(wm, ((0, 0), (0, 0), (0, 0), (0, cinp - cin)))
    return wm


def _make_kernel(H, W, Wp, HWp):
    inv_n = 1.0 / float(4 * H * W)

    def kernel(mask_ref, x_ref, w_ref, o_ref, acc_ref):
        # mask_ref: (1, HWp)         f32  1.0 on valid columns, 0.0 on the 2 pad cols/row
        # x_ref:    (1, tk, L)       bf16 flattened 1-padded input, channel tile
        # w_ref:    (4, 4, Cout, tk) bf16 per-(phase, tap) weight matrices
        # o_ref:    (1, 4, Cout, HWp) bf16 per-phase output, lane = flattened spatial
        # acc_ref:  (4, Cout, HWp)   f32  accumulator across channel tiles
        k = pl.program_id(1)
        nk = pl.num_programs(1)
        is_first = k == 0

        # 4 parity phases x 4 taps; each tap is a statically shifted lane window of
        # the flattened padded input -> (Cout, tk) @ (tk, HWp) on the MXU, f32 acc.
        for ph in range(2):
            for pw in range(2):
                p = 2 * ph + pw
                part = None
                for dh in range(2):
                    for dw in range(2):
                        s = (ph + dh) * Wp + (pw + dw)
                        xs = x_ref[0, :, pl.ds(s, HWp)]               # (tk, HWp) bf16
                        mm = lax.dot_general(
                            w_ref[p, 2 * dh + dw], xs,
                            dimension_numbers=(((1,), (0,)), ((), ())),
                            preferred_element_type=jnp.float32)        # (Cout, HWp)
                        part = mm if part is None else part + mm

                @pl.when(is_first)
                def _init(p=p, part=part):
                    acc_ref[p] = part

                @pl.when(jnp.logical_not(is_first))
                def _accum(p=p, part=part):
                    acc_ref[p] = acc_ref[p] + part

        @pl.when(k == nk - 1)
        def _finalize():
            m = mask_ref[...]                                          # (1, HWp)
            # InstanceNorm2d (affine=False, biased variance) over 4*H*W valid
            # positions per channel; junk pad columns masked out.  One (Cout, HWp)
            # temporary live at a time (no y0..y3 / d0..d3 materialization).
            s = None
            for p in range(4):
                sp = jnp.sum(acc_ref[p] * m, axis=1, keepdims=True)
                s = sp if s is None else s + sp
            mean = s * inv_n                                           # (Cout, 1)
            v = None
            for p in range(4):
                d = (acc_ref[p] - mean) * m
                vp = jnp.sum(d * d, axis=1, keepdims=True)
                v = vp if v is None else v + vp
            inv_std = lax.rsqrt(v * inv_n + EPS)                       # (Cout, 1)
            for p in range(4):
                z = (acc_ref[p] - mean) * inv_std
                o_ref[0, p] = jnp.where(z > 0, z, NEG_SLOPE * z).astype(o_ref.dtype)

    return kernel


@jax.jit
def unet_up_forward(x, skip_input, weight):
    """x: (N, Cin, H, W), skip_input: (N, Cs, 2H, 2W), weight: (Cin, Cout, 4, 4)."""
    N, Cin, H, W = x.shape
    Cout = weight.shape[1]
    Wp = W + 2                 # 1 pad column each side
    Hp = H + 3                 # 1 pad row top, 1 bottom + 1 guard row so every
    L = Hp * Wp                # flattened tap window stays in-bounds
    HWp = H * Wp

    tk, cinp = _choose_channel_tile(Cin)
    nk = cinp // tk

    xb = jnp.pad(x.astype(jnp.bfloat16),
                 ((0, 0), (0, cinp - Cin), (1, 2), (1, 1)))
    x_flat = xb.reshape(N, cinp, L)                                    # (N, cinp, L) bf16
    wm = _phase_tap_weight(weight, cinp)                               # (4,4,Cout,cinp) bf16
    valid = ((jnp.arange(HWp, dtype=jnp.int32) % Wp) < W).astype(jnp.float32)
    valid = valid.reshape(1, HWp)

    y4 = pl.pallas_call(
        _make_kernel(H, W, Wp, HWp),
        out_shape=jax.ShapeDtypeStruct((N, 4, Cout, HWp), jnp.bfloat16),
        grid_spec=pltpu.PrefetchScalarGridSpec(
            num_scalar_prefetch=0,
            grid=(N, nk),
            in_specs=[
                pl.BlockSpec((1, HWp), lambda n, k: (0, 0)),
                pl.BlockSpec((1, tk, L), lambda n, k: (n, k, 0)),
                pl.BlockSpec((4, 4, Cout, tk), lambda n, k: (0, 0, 0, k)),
            ],
            out_specs=pl.BlockSpec((1, 4, Cout, HWp), lambda n, k: (n, 0, 0, 0)),
            scratch_shapes=[pltpu.VMEM((4, Cout, HWp), jnp.float32)],
        ),
        compiler_params=pltpu.CompilerParams(
            dimension_semantics=("parallel", "arbitrary"),
            vmem_limit_bytes=_vmem_limit_bytes(),
        ),
    )(valid, x_flat, wm)

    # Stride-2 pixel shuffle of the 4 parity phases back to NCHW (pure bf16 data
    # movement), drop the 2 junk pad columns per row, channel-concat with skip.
    y = y4.reshape(N, 2, 2, Cout, H, Wp)[..., :W]
    y = y.transpose(0, 3, 4, 1, 5, 2).reshape(N, Cout, 2 * H, 2 * W)
    return jnp.concatenate([y.astype(jnp.float32), skip_input.astype(jnp.float32)], axis=1)


def unet_up_reference(x, skip_input, weight):
    """Pure-JAX reference matching PyTorch semantics (f32 math)."""
    rhs = weight[:, :, ::-1, ::-1].transpose(1, 0, 2, 3)               # (Cout, Cin, 4, 4)
    y = lax.conv_general_dilated(
        x.astype(jnp.float32), rhs.astype(jnp.float32),
        window_strides=(1, 1), padding=((2, 2), (2, 2)),
        lhs_dilation=(2, 2),
        dimension_numbers=("NCHW", "OIHW", "NCHW"),
        precision=lax.Precision.HIGHEST)
    mean = jnp.mean(y, axis=(2, 3), keepdims=True)
    var = jnp.mean((y - mean) ** 2, axis=(2, 3), keepdims=True)
    yn = (y - mean) * lax.rsqrt(var + EPS)
    yn = jnp.where(yn > 0, yn, NEG_SLOPE * yn)
    return jnp.concatenate([yn, skip_input.astype(yn.dtype)], axis=1)


if __name__ == "__main__":
    key = jax.random.PRNGKey(0)
    kx, ks, kw = jax.random.split(key, 3)

    N, in_size, out_size, H, W = 2, 8, 4, 16, 16
    x = jax.random.normal(kx, (N, in_size, H, W), dtype=jnp.float32)
    skip = jax.random.normal(ks, (N, out_size, 2 * H, 2 * W), dtype=jnp.float32)
    # ConvTranspose2d weight shape: (in_channels, out_channels, kH, kW)
    weight = jax.random.normal(kw, (in_size, out_size, 4, 4), dtype=jnp.float32) * 0.1

    out = jax.block_until_ready(unet_up_forward(x, skip, weight))

    # Reference with the same bf16 operand rounding the kernel applies internally
    # (kernel accumulates in f32; output is bf16 -> looser tolerance than before).
    xb = x.astype(jnp.bfloat16).astype(jnp.float32)
    wb = weight.astype(jnp.bfloat16).astype(jnp.float32)
    ref = unet_up_reference(xb, skip, wb)

    assert out.shape == (N, out_size + out_size, 2 * H, 2 * W), out.shape
    err = float(jnp.max(jnp.abs(out - ref)))
    assert err < 5e-2, err

    print("KERNEL_OK")
</pallas_src>

<mosaic_0001>
module attributes {stable_mosaic.version = 11 : i64} {
  func.func @kernel(%arg0: i32, %arg1: i32, %arg2: memref<1x288xf32, #tpu.memory_space<vmem>>, %arg3: memref<1x8x342xbf16, #tpu.memory_space<vmem>>, %arg4: memref<4x4x4x8xbf16, #tpu.memory_space<vmem>>, %arg5: memref<1x4x4x288xbf16, #tpu.memory_space<vmem>>, %arg6: memref<4x4x288xf32, #tpu.memory_space<vmem>>) attributes {dimension_semantics = [#tpu.dimension_semantics<parallel>, #tpu.dimension_semantics<arbitrary>], iteration_bounds = array<i64: 2, 1>, scalar_prefetch = 0 : i64, scratch_operands = 1 : i64, tpu.core_type = #tpu.core_type<tc>, window_params = [{pipeline_mode = #tpu.pipeline_mode<synchronous>, transform_indices = @transform_0, window_bounds = array<i64: 1, 288>}, {transform_indices = @transform_1, window_bounds = array<i64: 1, 8, 342>}, {transform_indices = @transform_2, window_bounds = array<i64: 4, 4, 4, 8>}, {transform_indices = @transform_3, window_bounds = array<i64: 1, 4, 4, 288>}]} {
    %c0_i32 = arith.constant 0 : i32
    %0 = arith.cmpi eq, %arg1, %c0_i32 : i32
    %c0 = arith.constant 0 : index
    %c0_0 = arith.constant 0 : index
    %c0_1 = arith.constant 0 : index
    %1 = vector.load %arg3[%c0, %c0_0, %c0_1] : memref<1x8x342xbf16, #tpu.memory_space<vmem>>, vector<1x8x288xbf16>
    %2 = vector.shape_cast %1 : vector<1x8x288xbf16> to vector<8x288xbf16>
    %c0_2 = arith.constant 0 : index
    %c0_3 = arith.constant 0 : index
    %c0_4 = arith.constant 0 : index
    %c0_5 = arith.constant 0 : index
    %3 = vector.load %arg4[%c0_2, %c0_3, %c0_4, %c0_5] : memref<4x4x4x8xbf16, #tpu.memory_space<vmem>>, vector<1x1x4x8xbf16>
    %4 = vector.shape_cast %3 : vector<1x1x4x8xbf16> to vector<4x8xbf16>
    %cst = arith.constant dense<0.000000e+00> : vector<4x288xf32>
    %5 = tpu.matmul %4, %2, %cst {dimension_numbers = #tpu.dot_dimension_numbers<[1], [0], [0], [1], [0, 0, 1, 1], [], []>} : vector<4x8xbf16>, vector<8x288xbf16>, vector<4x288xf32> -> vector<4x288xf32>
    %c0_6 = arith.constant 0 : index
    %c0_7 = arith.constant 0 : index
    %c1 = arith.constant 1 : index
    %6 = vector.load %arg3[%c0_6, %c0_7, %c1] : memref<1x8x342xbf16, #tpu.memory_space<vmem>>, vector<1x8x288xbf16>
    %7 = vector.shape_cast %6 : vector<1x8x288xbf16> to vector<8x288xbf16>
    %c0_8 = arith.constant 0 : index
    %c1_9 = arith.constant 1 : index
    %c0_10 = arith.constant 0 : index
    %c0_11 = arith.constant 0 : index
    %8 = vector.load %arg4[%c0_8, %c1_9, %c0_10, %c0_11] : memref<4x4x4x8xbf16, #tpu.memory_space<vmem>>, vector<1x1x4x8xbf16>
    %9 = vector.shape_cast %8 : vector<1x1x4x8xbf16> to vector<4x8xbf16>
    %cst_12 = arith.constant dense<0.000000e+00> : vector<4x288xf32>
    %10 = tpu.matmul %9, %7, %cst_12 {dimension_numbers = #tpu.dot_dimension_numbers<[1], [0], [0], [1], [0, 0, 1, 1], [], []>} : vector<4x8xbf16>, vector<8x288xbf16>, vector<4x288xf32> -> vector<4x288xf32>
    %11 = arith.addf %5, %10 : vector<4x288xf32>
    %c0_13 = arith.constant 0 : index
    %c0_14 = arith.constant 0 : index
    %c18 = arith.constant 18 : index
    %12 = vector.load %arg3[%c0_13, %c0_14, %c18] : memref<1x8x342xbf16, #tpu.memory_space<vmem>>, vector<1x8x288xbf16>
    %13 = vector.shape_cast %12 : vector<1x8x288xbf16> to vector<8x288xbf16>
    %c0_15 = arith.constant 0 : index
    %c2 = arith.constant 2 : index
    %c0_16 = arith.constant 0 : index
    %c0_17 = arith.constant 0 : index
    %14 = vector.load %arg4[%c0_15, %c2, %c0_16, %c0_17] : memref<4x4x4x8xbf16, #tpu.memory_space<vmem>>, vector<1x1x4x8xbf16>
    %15 = vector.shape_cast %14 : vector<1x1x4x8xbf16> to vector<4x8xbf16>
    %cst_18 = arith.constant dense<0.000000e+00> : vector<4x288xf32>
    %16 = tpu.matmul %15, %13, %cst_18 {dimension_numbers = #tpu.dot_dimension_numbers<[1], [0], [0], [1], [0, 0, 1, 1], [], []>} : vector<4x8xbf16>, vector<8x288xbf16>, vector<4x288xf32> -> vector<4x288xf32>
    %17 = arith.addf %11, %16 : vector<4x288xf32>
    %c0_19 = arith.constant 0 : index
    %c0_20 = arith.constant 0 : index
    %c19 = arith.constant 19 : index
    %18 = vector.load %arg3[%c0_19, %c0_20, %c19] : memref<1x8x342xbf16, #tpu.memory_space<vmem>>, vector<1x8x288xbf16>
    %19 = vector.shape_cast %18 : vector<1x8x288xbf16> to vector<8x288xbf16>
    %c0_21 = arith.constant 0 : index
    %c3 = arith.constant 3 : index
    %c0_22 = arith.constant 0 : index
    %c0_23 = arith.constant 0 : index
    %20 = vector.load %arg4[%c0_21, %c3, %c0_22, %c0_23] : memref<4x4x4x8xbf16, #tpu.memory_space<vmem>>, vector<1x1x4x8xbf16>
    %21 = vector.shape_cast %20 : vector<1x1x4x8xbf16> to vector<4x8xbf16>
    %cst_24 = arith.constant dense<0.000000e+00> : vector<4x288xf32>
    %22 = tpu.matmul %21, %19, %cst_24 {dimension_numbers = #tpu.dot_dimension_numbers<[1], [0], [0], [1], [0, 0, 1, 1], [], []>} : vector<4x8xbf16>, vector<8x288xbf16>, vector<4x288xf32> -> vector<4x288xf32>
    %23 = arith.addf %17, %22 : vector<4x288xf32>
    %24 = arith.extui %0 : i1 to i32
    %c0_i32_25 = arith.constant 0 : i32
    %25 = arith.cmpi ne, %24, %c0_i32_25 : i32
    scf.if %25 {
      %c0_130 = arith.constant 0 : index
      %c0_131 = arith.constant 0 : index
      %c0_132 = arith.constant 0 : index
      %116 = vector.load %arg6[%c0_130, %c0_131, %c0_132] : memref<4x4x288xf32, #tpu.memory_space<vmem>>, vector<1x4x288xf32>
      %117 = vector.shape_cast %116 : vector<1x4x288xf32> to vector<4x288xf32>
      %118 = vector.shape_cast %23 : vector<4x288xf32> to vector<1x4x288xf32>
      tpu.vector_store %arg6[%c0_130, %c0_131, %c0_132], %118 {strides = array<i32>} : memref<4x4x288xf32, #tpu.memory_space<vmem>>, vector<1x4x288xf32>,
    } else {
    }
    %true = arith.constant true
    %26 = arith.xori %0, %true : i1
    %27 = arith.extui %26 : i1 to i32
    %c0_i32_26 = arith.constant 0 : i32
    %28 = arith.cmpi ne, %27, %c0_i32_26 : i32
    scf.if %28 {
      %c0_130 = arith.constant 0 : index
      %c0_131 = arith.constant 0 : index
      %c0_132 = arith.constant 0 : index
      %116 = vector.load %arg6[%c0_130, %c0_131, %c0_132] : memref<4x4x288xf32, #tpu.memory_space<vmem>>, vector<1x4x288xf32>
      %117 = vector.shape_cast %116 : vector<1x4x288xf32> to vector<4x288xf32>
      %118 = arith.addf %117, %23 : vector<4x288xf32>
      %c0_133 = arith.constant 0 : index
      %c0_134 = arith.constant 0 : index
      %c0_135 = arith.constant 0 : index
      %119 = vector.load %arg6[%c0_133, %c0_134, %c0_135] : memref<4x4x288xf32, #tpu.memory_space<vmem>>, vector<1x4x288xf32>
      %120 = vector.shape_cast %119 : vector<1x4x288xf32> to vector<4x288xf32>
      %121 = vector.shape_cast %118 : vector<4x288xf32> to vector<1x4x288xf32>
      tpu.vector_store %arg6[%c0_133, %c0_134, %c0_135], %121 {strides = array<i32>} : memref<4x4x288xf32, #tpu.memory_space<vmem>>, vector<1x4x288xf32>,
    } else {
    }
    %c0_27 = arith.constant 0 : index
    %c0_28 = arith.constant 0 : index
    %c1_29 = arith.constant 1 : index
    %29 = vector.load %arg3[%c0_27, %c0_28, %c1_29] : memref<1x8x342xbf16, #tpu.memory_space<vmem>>, vector<1x8x288xbf16>
    %30 = vector.shape_cast %29 : vector<1x8x288xbf16> to vector<8x288xbf16>
    %c1_30 = arith.constant 1 : index
    %c0_31 = arith.constant 0 : index
    %c0_32 = arith.constant 0 : index
    %c0_33 = arith.constant 0 : index
    %31 = vector.load %arg4[%c1_30, %c0_31, %c0_32, %c0_33] : memref<4x4x4x8xbf16, #tpu.memory_space<vmem>>, vector<1x1x4x8xbf16>
    %32 = vector.shape_cast %31 : vector<1x1x4x8xbf16> to vector<4x8xbf16>
    %cst_34 = arith.constant dense<0.000000e+00> : vector<4x288xf32>
    %33 = tpu.matmul %32, %30, %cst_34 {dimension_numbers = #tpu.dot_dimension_numbers<[1], [0], [0], [1], [0, 0, 1, 1], [], []>} : vector<4x8xbf16>, vector<8x288xbf16>, vector<4x288xf32> -> vector<4x288xf32>
    %c0_35 = arith.constant 0 : index
    %c0_36 = arith.constant 0 : index
    %c2_37 = arith.constant 2 : index
    %34 = vector.load %arg3[%c0_35, %c0_36, %c2_37] : memref<1x8x342xbf16, #tpu.memory_space<vmem>>, vector<1x8x288xbf16>
    %35 = vector.shape_cast %34 : vector<1x8x288xbf16> to vector<8x288xbf16>
    %c1_38 = arith.constant 1 : index
    %c1_39 = arith.constant 1 : index
    %c0_40 = arith.constant 0 : index
    %c0_41 = arith.constant 0 : index
    %36 = vector.load %arg4[%c1_38, %c1_39, %c0_40, %c0_41] : memref<4x4x4x8xbf16, #tpu.memory_space<vmem>>, vector<1x1x4x8xbf16>
    %37 = vector.shape_cast %36 : vector<1x1x4x8xbf16> to vector<4x8xbf16>
    %cst_42 = arith.constant dense<0.000000e+00> : vector<4x288xf32>
    %38 = tpu.matmul %37, %35, %cst_42 {dimension_numbers = #tpu.dot_dimension_numbers<[1], [0], [0], [1], [0, 0, 1, 1], [], []>} : vector<4x8xbf16>, vector<8x288xbf16>, vector<4x288xf32> -> vector<4x288xf32>
    %39 = arith.addf %33, %38 : vector<4x288xf32>
    %c0_43 = arith.constant 0 : index
    %c0_44 = arith.constant 0 : index
    %c19_45 = arith.constant 19 : index
    %40 = vector.load %arg3[%c0_43, %c0_44, %c19_45] : memref<1x8x342xbf16, #tpu.memory_space<vmem>>, vector<1x8x288xbf16>
    %41 = vector.shape_cast %40 : vector<1x8x288xbf16> to vector<8x288xbf16>
    %c1_46 = arith.constant 1 : index
    %c2_47 = arith.constant 2 : index
    %c0_48 = arith.constant 0 : index
    %c0_49 = arith.constant 0 : index
    %42 = vector.load %arg4[%c1_46, %c2_47, %c0_48, %c0_49] : memref<4x4x4x8xbf16, #tpu.memory_space<vmem>>, vector<1x1x4x8xbf16>
    %43 = vector.shape_cast %42 : vector<1x1x4x8xbf16> to vector<4x8xbf16>
    %cst_50 = arith.constant dense<0.000000e+00> : vector<4x288xf32>
    %44 = tpu.matmul %43, %41, %cst_50 {dimension_numbers = #tpu.dot_dimension_numbers<[1], [0], [0], [1], [0, 0, 1, 1], [], []>} : vector<4x8xbf16>, vector<8x288xbf16>, vector<4x288xf32> -> vector<4x288xf32>
    %45 = arith.addf %39, %44 : vector<4x288xf32>
    %c0_51 = arith.constant 0 : index
    %c0_52 = arith.constant 0 : index
    %c20 = arith.constant 20 : index
    %46 = vector.load %arg3[%c0_51, %c0_52, %c20] : memref<1x8x342xbf16, #tpu.memory_space<vmem>>, vector<1x8x288xbf16>
    %47 = vector.shape_cast %46 : vector<1x8x288xbf16> to vector<8x288xbf16>
    %c1_53 = arith.constant 1 : index
    %c3_54 = arith.constant 3 : index
    %c0_55 = arith.constant 0 : index
    %c0_56 = arith.constant 0 : index
    %48 = vector.load %arg4[%c1_53, %c3_54, %c0_55, %c0_56] : memref<4x4x4x8xbf16, #tpu.memory_space<vmem>>, vector<1x1x4x8xbf16>
    %49 = vector.shape_cast %48 : vector<1x1x4x8xbf16> to vector<4x8xbf16>
    %cst_57 = arith.constant dense<0.000000e+00> : vector<4x288xf32>
    %50 = tpu.matmul %49, %47, %cst_57 {dimension_numbers = #tpu.dot_dimension_numbers<[1], [0], [0], [1], [0, 0, 1, 1], [], []>} : vector<4x8xbf16>, vector<8x288xbf16>, vector<4x288xf32> -> vector<4x288xf32>
    %51 = arith.addf %45, %50 : vector<4x288xf32>
    %52 = arith.extui %0 : i1 to i32
    %c0_i32_58 = arith.constant 0 : i32
    %53 = arith.cmpi ne, %52, %c0_i32_58 : i32
    scf.if %53 {
      %c1_130 = arith.constant 1 : index
      %c0_131 = arith.constant 0 : index
      %c0_132 = arith.constant 0 : index
      %116 = vector.load %arg6[%c1_130, %c0_131, %c0_132] : memref<4x4x288xf32, #tpu.memory_space<vmem>>, vector<1x4x288xf32>
      %117 = vector.shape_cast %116 : vector<1x4x288xf32> to vector<4x288xf32>
      %118 = vector.shape_cast %51 : vector<4x288xf32> to vector<1x4x288xf32>
      tpu.vector_store %arg6[%c1_130, %c0_131, %c0_132], %118 {strides = array<i32>} : memref<4x4x288xf32, #tpu.memory_space<vmem>>, vector<1x4x288xf32>,
    } else {
    }
    %true_59 = arith.constant true
    %54 = arith.xori %0, %true_59 : i1
    %55 = arith.extui %54 : i1 to i32
    %c0_i32_60 = arith.constant 0 : i32
    %56 = arith.cmpi ne, %55, %c0_i32_60 : i32
    scf.if %56 {
      %c1_130 = arith.constant 1 : index
      %c0_131 = arith.constant 0 : index
      %c0_132 = arith.constant 0 : index
      %116 = vector.load %arg6[%c1_130, %c0_131, %c0_132] : memref<4x4x288xf32, #tpu.memory_space<vmem>>, vector<1x4x288xf32>
      %117 = vector.shape_cast %116 : vector<1x4x288xf32> to vector<4x288xf32>
      %118 = arith.addf %117, %51 : vector<4x288xf32>
      %c1_133 = arith.constant 1 : index
      %c0_134 = arith.constant 0 : index
      %c0_135 = arith.constant 0 : index
      %119 = vector.load %arg6[%c1_133, %c0_134, %c0_135] : memref<4x4x288xf32, #tpu.memory_space<vmem>>, vector<1x4x288xf32>
      %120 = vector.shape_cast %119 : vector<1x4x288xf32> to vector<4x288xf32>
      %121 = vector.shape_cast %118 : vector<4x288xf32> to vector<1x4x288xf32>
      tpu.vector_store %arg6[%c1_133, %c0_134, %c0_135], %121 {strides = array<i32>} : memref<4x4x288xf32, #tpu.memory_space<vmem>>, vector<1x4x288xf32>,
    } else {
    }
    %c0_61 = arith.constant 0 : index
    %c0_62 = arith.constant 0 : index
    %c18_63 = arith.constant 18 : index
    %57 = vector.load %arg3[%c0_61, %c0_62, %c18_63] : memref<1x8x342xbf16, #tpu.memory_space<vmem>>, vector<1x8x288xbf16>
    %58 = vector.shape_cast %57 : vector<1x8x288xbf16> to vector<8x288xbf16>
    %c2_64 = arith.constant 2 : index
    %c0_65 = arith.constant 0 : index
    %c0_66 = arith.constant 0 : index
    %c0_67 = arith.constant 0 : index
    %59 = vector.load %arg4[%c2_64, %c0_65, %c0_66, %c0_67] : memref<4x4x4x8xbf16, #tpu.memory_space<vmem>>, vector<1x1x4x8xbf16>
    %60 = vector.shape_cast %59 : vector<1x1x4x8xbf16> to vector<4x8xbf16>
    %cst_68 = arith.constant dense<0.000000e+00> : vector<4x288xf32>
    %61 = tpu.matmul %60, %58, %cst_68 {dimension_numbers = #tpu.dot_dimension_numbers<[1], [0], [0], [1], [0, 0, 1, 1], [], []>} : vector<4x8xbf16>, vector<8x288xbf16>, vector<4x288xf32> -> vector<4x288xf32>
    %c0_69 = arith.constant 0 : index
    %c0_70 = arith.constant 0 : index
    %c19_71 = arith.constant 19 : index
    %62 = vector.load %arg3[%c0_69, %c0_70, %c19_71] : memref<1x8x342xbf16, #tpu.memory_space<vmem>>, vector<1x8x288xbf16>
    %63 = vector.shape_cast %62 : vector<1x8x288xbf16> to vector<8x288xbf16>
    %c2_72 = arith.constant 2 : index
    %c1_73 = arith.constant 1 : index
    %c0_74 = arith.constant 0 : index
    %c0_75 = arith.constant 0 : index
    %64 = vector.load %arg4[%c2_72, %c1_73, %c0_74, %c0_75] : memref<4x4x4x8xbf16, #tpu.memory_space<vmem>>, vector<1x1x4x8xbf16>
    %65 = vector.shape_cast %64 : vector<1x1x4x8xbf16> to vector<4x8xbf16>
    %cst_76 = arith.constant dense<0.000000e+00> : vector<4x288xf32>
    %66 = tpu.matmul %65, %63, %cst_76 {dimension_numbers = #tpu.dot_dimension_numbers<[1], [0], [0], [1], [0, 0, 1, 1], [], []>} : vector<4x8xbf16>, vector<8x288xbf16>, vector<4x288xf32> -> vector<4x288xf32>
    %67 = arith.addf %61, %66 : vector<4x288xf32>
    %c0_77 = arith.constant 0 : index
    %c0_78 = arith.constant 0 : index
    %c36 = arith.constant 36 : index
    %68 = vector.load %arg3[%c0_77, %c0_78, %c36] : memref<1x8x342xbf16, #tpu.memory_space<vmem>>, vector<1x8x288xbf16>
    %69 = vector.shape_cast %68 : vector<1x8x288xbf16> to vector<8x288xbf16>
    %c2_79 = arith.constant 2 : index
    %c2_80 = arith.constant 2 : index
    %c0_81 = arith.constant 0 : index
    %c0_82 = arith.constant 0 : index
    %70 = vector.load %arg4[%c2_79, %c2_80, %c0_81, %c0_82] : memref<4x4x4x8xbf16, #tpu.memory_space<vmem>>, vector<1x1x4x8xbf16>
    %71 = vector.shape_cast %70 : vector<1x1x4x8xbf16> to vector<4x8xbf16>
    %cst_83 = arith.constant dense<0.000000e+00> : vector<4x288xf32>
    %72 = tpu.matmul %71, %69, %cst_83 {dimension_numbers = #tpu.dot_dimension_numbers<[1], [0], [0], [1], [0, 0, 1, 1], [], []>} : vector<4x8xbf16>, vector<8x288xbf16>, vector<4x288xf32> -> vector<4x288xf32>
    %73 = arith.addf %67, %72 : vector<4x288xf32>
    %c0_84 = arith.constant 0 : index
    %c0_85 = arith.constant 0 : index
    %c37 = arith.constant 37 : index
    %74 = vector.load %arg3[%c0_84, %c0_85, %c37] : memref<1x8x342xbf16, #tpu.memory_space<vmem>>, vector<1x8x288xbf16>
    %75 = vector.shape_cast %74 : vector<1x8x288xbf16> to vector<8x288xbf16>
    %c2_86 = arith.constant 2 : index
    %c3_87 = arith.constant 3 : index
    %c0_88 = arith.constant 0 : index
    %c0_89 = arith.constant 0 : index
    %76 = vector.load %arg4[%c2_86, %c3_87, %c0_88, %c0_89] : memref<4x4x4x8xbf16, #tpu.memory_space<vmem>>, vector<1x1x4x8xbf16>
    %77 = vector.shape_cast %76 : vector<1x1x4x8xbf16> to vector<4x8xbf16>
    %cst_90 = arith.constant dense<0.000000e+00> : vector<4x288xf32>
    %78 = tpu.matmul %77, %75, %cst_90 {dimension_numbers = #tpu.dot_dimension_numbers<[1], [0], [0], [1], [0, 0, 1, 1], [], []>} : vector<4x8xbf16>, vector<8x288xbf16>, vector<4x288xf32> -> vector<4x288xf32>
    %79 = arith.addf %73, %78 : vector<4x288xf32>
    %80 = arith.extui %0 : i1 to i32
    %c0_i32_91 = arith.constant 0 : i32
    %81 = arith.cmpi ne, %80, %c0_i32_91 : i32
    scf.if %81 {
      %c2_130 = arith.constant 2 : index
      %c0_131 = arith.constant 0 : index
      %c0_132 = arith.constant 0 : index
      %116 = vector.load %arg6[%c2_130, %c0_131, %c0_132] : memref<4x4x288xf32, #tpu.memory_space<vmem>>, vector<1x4x288xf32>
      %117 = vector.shape_cast %116 : vector<1x4x288xf32> to vector<4x288xf32>
      %118 = vector.shape_cast %79 : vector<4x288xf32> to vector<1x4x288xf32>
      tpu.vector_store %arg6[%c2_130, %c0_131, %c0_132], %118 {strides = array<i32>} : memref<4x4x288xf32, #tpu.memory_space<vmem>>, vector<1x4x288xf32>,
    } else {
    }
    %true_92 = arith.constant true
    %82 = arith.xori %0, %true_92 : i1
    %83 = arith.extui %82 : i1 to i32
    %c0_i32_93 = arith.constant 0 : i32
    %84 = arith.cmpi ne, %83, %c0_i32_93 : i32
    scf.if %84 {
      %c2_130 = arith.constant 2 : index
      %c0_131 = arith.constant 0 : index
      %c0_132 = arith.constant 0 : index
      %116 = vector.load %arg6[%c2_130, %c0_131, %c0_132] : memref<4x4x288xf32, #tpu.memory_space<vmem>>, vector<1x4x288xf32>
      %117 = vector.shape_cast %116 : vector<1x4x288xf32> to vector<4x288xf32>
      %118 = arith.addf %117, %79 : vector<4x288xf32>
      %c2_133 = arith.constant 2 : index
      %c0_134 = arith.constant 0 : index
      %c0_135 = arith.constant 0 : index
      %119 = vector.load %arg6[%c2_133, %c0_134, %c0_135] : memref<4x4x288xf32, #tpu.memory_space<vmem>>, vector<1x4x288xf32>
      %120 = vector.shape_cast %119 : vector<1x4x288xf32> to vector<4x288xf32>
      %121 = vector.shape_cast %118 : vector<4x288xf32> to vector<1x4x288xf32>
      tpu.vector_store %arg6[%c2_133, %c0_134, %c0_135], %121 {strides = array<i32>} : memref<4x4x288xf32, #tpu.memory_space<vmem>>, vector<1x4x288xf32>,
    } else {
    }
    %c0_94 = arith.constant 0 : index
    %c0_95 = arith.constant 0 : index
    %c19_96 = arith.constant 19 : index
    %85 = vector.load %arg3[%c0_94, %c0_95, %c19_96] : memref<1x8x342xbf16, #tpu.memory_space<vmem>>, vector<1x8x288xbf16>
    %86 = vector.shape_cast %85 : vector<1x8x288xbf16> to vector<8x288xbf16>
    %c3_97 = arith.constant 3 : index
    %c0_98 = arith.constant 0 : index
    %c0_99 = arith.constant 0 : index
    %c0_100 = arith.constant 0 : index
    %87 = vector.load %arg4[%c3_97, %c0_98, %c0_99, %c0_100] : memref<4x4x4x8xbf16, #tpu.memory_space<vmem>>, vector<1x1x4x8xbf16>
    %88 = vector.shape_cast %87 : vector<1x1x4x8xbf16> to vector<4x8xbf16>
    %cst_101 = arith.constant dense<0.000000e+00> : vector<4x288xf32>
    %89 = tpu.matmul %88, %86, %cst_101 {dimension_numbers = #tpu.dot_dimension_numbers<[1], [0], [0], [1], [0, 0, 1, 1], [], []>} : vector<4x8xbf16>, vector<8x288xbf16>, vector<4x288xf32> -> vector<4x288xf32>
    %c0_102 = arith.constant 0 : index
    %c0_103 = arith.constant 0 : index
    %c20_104 = arith.constant 20 : index
    %90 = vector.load %arg3[%c0_102, %c0_103, %c20_104] : memref<1x8x342xbf16, #tpu.memory_space<vmem>>, vector<1x8x288xbf16>
    %91 = vector.shape_cast %90 : vector<1x8x288xbf16> to vector<8x288xbf16>
    %c3_105 = arith.constant 3 : index
    %c1_106 = arith.constant 1 : index
    %c0_107 = arith.constant 0 : index
    %c0_108 = arith.constant 0 : index
    %92 = vector.load %arg4[%c3_105, %c1_106, %c0_107, %c0_108] : memref<4x4x4x8xbf16, #tpu.memory_space<vmem>>, vector<1x1x4x8xbf16>
    %93 = vector.shape_cast %92 : vector<1x1x4x8xbf16> to vector<4x8xbf16>
    %cst_109 = arith.constant dense<0.000000e+00> : vector<4x288xf32>
    %94 = tpu.matmul %93, %91, %cst_109 {dimension_numbers = #tpu.dot_dimension_numbers<[1], [0], [0], [1], [0, 0, 1, 1], [], []>} : vector<4x8xbf16>, vector<8x288xbf16>, vector<4x288xf32> -> vector<4x288xf32>
    %95 = arith.addf %89, %94 : vector<4x288xf32>
    %c0_110 = arith.constant 0 : index
    %c0_111 = arith.constant 0 : index
    %c37_112 = arith.constant 37 : index
    %96 = vector.load %arg3[%c0_110, %c0_111, %c37_112] : memref<1x8x342xbf16, #tpu.memory_space<vmem>>, vector<1x8x288xbf16>
    %97 = vector.shape_cast %96 : vector<1x8x288xbf16> to vector<8x288xbf16>
    %c3_113 = arith.constant 3 : index
    %c2_114 = arith.constant 2 : index
    %c0_115 = arith.constant 0 : index
    %c0_116 = arith.constant 0 : index
    %98 = vector.load %arg4[%c3_113, %c2_114, %c0_115, %c0_116] : memref<4x4x4x8xbf16, #tpu.memory_space<vmem>>, vector<1x1x4x8xbf16>
    %99 = vector.shape_cast %98 : vector<1x1x4x8xbf16> to vector<4x8xbf16>
    %cst_117 = arith.constant dense<0.000000e+00> : vector<4x288xf32>
    %100 = tpu.matmul %99, %97, %cst_117 {dimension_numbers = #tpu.dot_dimension_numbers<[1], [0], [0], [1], [0, 0, 1, 1], [], []>} : vector<4x8xbf16>, vector<8x288xbf16>, vector<4x288xf32> -> vector<4x288xf32>
    %101 = arith.addf %95, %100 : vector<4x288xf32>
    %c0_118 = arith.constant 0 : index
    %c0_119 = arith.constant 0 : index
    %c38 = arith.constant 38 : index
    %102 = vector.load %arg3[%c0_118, %c0_119, %c38] : memref<1x8x342xbf16, #tpu.memory_space<vmem>>, vector<1x8x288xbf16>
    %103 = vector.shape_cast %102 : vector<1x8x288xbf16> to vector<8x288xbf16>
    %c3_120 = arith.constant 3 : index
    %c3_121 = arith.constant 3 : index
    %c0_122 = arith.constant 0 : index
    %c0_123 = arith.constant 0 : index
    %104 = vector.load %arg4[%c3_120, %c3_121, %c0_122, %c0_123] : memref<4x4x4x8xbf16, #tpu.memory_space<vmem>>, vector<1x1x4x8xbf16>
    %105 = vector.shape_cast %104 : vector<1x1x4x8xbf16> to vector<4x8xbf16>
    %cst_124 = arith.constant dense<0.000000e+00> : vector<4x288xf32>
    %106 = tpu.matmul %105, %103, %cst_124 {dimension_numbers = #tpu.dot_dimension_numbers<[1], [0], [0], [1], [0, 0, 1, 1], [], []>} : vector<4x8xbf16>, vector<8x288xbf16>, vector<4x288xf32> -> vector<4x288xf32>
    %107 = arith.addf %101, %106 : vector<4x288xf32>
    %108 = arith.extui %0 : i1 to i32
    %c0_i32_125 = arith.constant 0 : i32
    %109 = arith.cmpi ne, %108, %c0_i32_125 : i32
    scf.if %109 {
      %c3_130 = arith.constant 3 : index
      %c0_131 = arith.constant 0 : index
      %c0_132 = arith.constant 0 : index
      %116 = vector.load %arg6[%c3_130, %c0_131, %c0_132] : memref<4x4x288xf32, #tpu.memory_space<vmem>>, vector<1x4x288xf32>
      %117 = vector.shape_cast %116 : vector<1x4x288xf32> to vector<4x288xf32>
      %118 = vector.shape_cast %107 : vector<4x288xf32> to vector<1x4x288xf32>
      tpu.vector_store %arg6[%c3_130, %c0_131, %c0_132], %118 {strides = array<i32>} : memref<4x4x288xf32, #tpu.memory_space<vmem>>, vector<1x4x288xf32>,
    } else {
    }
    %true_126 = arith.constant true
    %110 = arith.xori %0, %true_126 : i1
    %111 = arith.extui %110 : i1 to i32
    %c0_i32_127 = arith.constant 0 : i32
    %112 = arith.cmpi ne, %111, %c0_i32_127 : i32
    scf.if %112 {
      %c3_130 = arith.constant 3 : index
      %c0_131 = arith.constant 0 : index
      %c0_132 = arith.constant 0 : index
      %116 = vector.load %arg6[%c3_130, %c0_131, %c0_132] : memref<4x4x288xf32, #tpu.memory_space<vmem>>, vector<1x4x288xf32>
      %117 = vector.shape_cast %116 : vector<1x4x288xf32> to vector<4x288xf32>
      %118 = arith.addf %117, %107 : vector<4x288xf32>
      %c3_133 = arith.constant 3 : index
      %c0_134 = arith.constant 0 : index
      %c0_135 = arith.constant 0 : index
      %119 = vector.load %arg6[%c3_133, %c0_134, %c0_135] : memref<4x4x288xf32, #tpu.memory_space<vmem>>, vector<1x4x288xf32>
      %120 = vector.shape_cast %119 : vector<1x4x288xf32> to vector<4x288xf32>
      %121 = vector.shape_cast %118 : vector<4x288xf32> to vector<1x4x288xf32>
      tpu.vector_store %arg6[%c3_133, %c0_134, %c0_135], %121 {strides = array<i32>} : memref<4x4x288xf32, #tpu.memory_space<vmem>>, vector<1x4x288xf32>,
    } else {
    }
    %c0_i32_128 = arith.constant 0 : i32
    %113 = arith.cmpi eq, %arg1, %c0_i32_128 : i32
    %114 = arith.extui %113 : i1 to i32
    %c0_i32_129 = arith.constant 0 : i32
    %115 = arith.cmpi ne, %114, %c0_i32_129 : i32
    scf.if %115 {
      %c0_130 = arith.constant 0 : index
      %c0_131 = arith.constant 0 : index
      %116 = vector.load %arg2[%c0_130, %c0_131] : memref<1x288xf32, #tpu.memory_space<vmem>>, vector<1x288xf32>
      %c0_132 = arith.constant 0 : index
      %c0_133 = arith.constant 0 : index
      %c0_134 = arith.constant 0 : index
      %117 = vector.load %arg6[%c0_132, %c0_133, %c0_134] : memref<4x4x288xf32, #tpu.memory_space<vmem>>, vector<1x4x288xf32>
      %118 = vector.shape_cast %117 : vector<1x4x288xf32> to vector<4x288xf32>
      %119 = vector.broadcast %116 : vector<1x288xf32> to vector<4x288xf32>
      %120 = arith.mulf %118, %119 : vector<4x288xf32>
      %cst_135 = arith.constant dense<0.000000e+00> : vector<4xf32>
      %121 = vector.multi_reduction <add>, %120, %cst_135 [1] : vector<4x288xf32> to vector<4xf32>
      %122 = vector.shape_cast %121 : vector<4xf32> to vector<4x1xf32>
      %c1_136 = arith.constant 1 : index
      %c0_137 = arith.constant 0 : index
      %c0_138 = arith.constant 0 : index
      %123 = vector.load %arg6[%c1_136, %c0_137, %c0_138] : memref<4x4x288xf32, #tpu.memory_space<vmem>>, vector<1x4x288xf32>
      %124 = vector.shape_cast %123 : vector<1x4x288xf32> to vector<4x288xf32>
      %125 = vector.broadcast %116 : vector<1x288xf32> to vector<4x288xf32>
      %126 = arith.mulf %124, %125 : vector<4x288xf32>
      %cst_139 = arith.constant dense<0.000000e+00> : vector<4xf32>
      %127 = vector.multi_reduction <add>, %126, %cst_139 [1] : vector<4x288xf32> to vector<4xf32>
      %128 = vector.shape_cast %127 : vector<4xf32> to vector<4x1xf32>
      %129 = arith.addf %122, %128 : vector<4x1xf32>
      %c2_140 = arith.constant 2 : index
      %c0_141 = arith.constant 0 : index
      %c0_142 = arith.constant 0 : index
      %130 = vector.load %arg6[%c2_140, %c0_141, %c0_142] : memref<4x4x288xf32, #tpu.memory_space<vmem>>, vector<1x4x288xf32>
      %131 = vector.shape_cast %130 : vector<1x4x288xf32> to vector<4x288xf32>
      %132 = vector.broadcast %116 : vector<1x288xf32> to vector<4x288xf32>
      %133 = arith.mulf %131, %132 : vector<4x288xf32>
      %cst_143 = arith.constant dense<0.000000e+00> : vector<4xf32>
      %134 = vector.multi_reduction <add>, %133, %cst_143 [1] : vector<4x288xf32> to vector<4xf32>
      %135 = vector.shape_cast %134 : vector<4xf32> to vector<4x1xf32>
      %136 = arith.addf %129, %135 : vector<4x1xf32>
      %c3_144 = arith.constant 3 : index
      %c0_145 = arith.constant 0 : index
      %c0_146 = arith.constant 0 : index
      %137 = vector.load %arg6[%c3_144, %c0_145, %c0_146] : memref<4x4x288xf32, #tpu.memory_space<vmem>>, vector<1x4x288xf32>
      %138 = vector.shape_cast %137 : vector<1x4x288xf32> to vector<4x288xf32>
      %139 = vector.broadcast %116 : vector<1x288xf32> to vector<4x288xf32>
      %140 = arith.mulf %138, %139 : vector<4x288xf32>
      %cst_147 = arith.constant dense<0.000000e+00> : vector<4xf32>
      %141 = vector.multi_reduction <add>, %140, %cst_147 [1] : vector<4x288xf32> to vector<4xf32>
      %142 = vector.shape_cast %141 : vector<4xf32> to vector<4x1xf32>
      %143 = arith.addf %136, %142 : vector<4x1xf32>
      %cst_148 = arith.constant 9.765625E-4 : f32
      %144 = vector.broadcast %cst_148 : f32 to vector<4x1xf32>
      %145 = arith.mulf %143, %144 : vector<4x1xf32>
      %c0_149 = arith.constant 0 : index
      %c0_150 = arith.constant 0 : index
      %c0_151 = arith.constant 0 : index
      %146 = vector.load %arg6[%c0_149, %c0_150, %c0_151] : memref<4x4x288xf32, #tpu.memory_space<vmem>>, vector<1x4x288xf32>
      %147 = vector.shape_cast %146 : vector<1x4x288xf32> to vector<4x288xf32>
      %148 = vector.broadcast %145 : vector<4x1xf32> to vector<4x288xf32>
      %149 = arith.subf %147, %148 : vector<4x288xf32>
      %150 = vector.broadcast %116 : vector<1x288xf32> to vector<4x288xf32>
      %151 = arith.mulf %149, %150 : vector<4x288xf32>
      %152 = arith.mulf %151, %151 : vector<4x288xf32>
      %cst_152 = arith.constant dense<0.000000e+00> : vector<4xf32>
      %153 = vector.multi_reduction <add>, %152, %cst_152 [1] : vector<4x288xf32> to vector<4xf32>
      %154 = vector.shape_cast %153 : vector<4xf32> to vector<4x1xf32>
      %c1_153 = arith.constant 1 : index
      %c0_154 = arith.constant 0 : index
      %c0_155 = arith.constant 0 : index
      %155 = vector.load %arg6[%c1_153, %c0_154, %c0_155] : memref<4x4x288xf32, #tpu.memory_space<vmem>>, vector<1x4x288xf32>
      %156 = vector.shape_cast %155 : vector<1x4x288xf32> to vector<4x288xf32>
      %157 = vector.broadcast %145 : vector<4x1xf32> to vector<4x288xf32>
      %158 = arith.subf %156, %157 : vector<4x288xf32>
      %159 = vector.broadcast %116 : vector<1x288xf32> to vector<4x288xf32>
      %160 = arith.mulf %158, %159 : vector<4x288xf32>
      %161 = arith.mulf %160, %160 : vector<4x288xf32>
      %cst_156 = arith.constant dense<0.000000e+00> : vector<4xf32>
      %162 = vector.multi_reduction <add>, %161, %cst_156 [1] : vector<4x288xf32> to vector<4xf32>
      %163 = vector.shape_cast %162 : vector<4xf32> to vector<4x1xf32>
      %164 = arith.addf %154, %163 : vector<4x1xf32>
      %c2_157 = arith.constant 2 : index
      %c0_158 = arith.constant 0 : index
      %c0_159 = arith.constant 0 : index
      %165 = vector.load %arg6[%c2_157, %c0_158, %c0_159] : memref<4x4x288xf32, #tpu.memory_space<vmem>>, vector<1x4x288xf32>
      %166 = vector.shape_cast %165 : vector<1x4x288xf32> to vector<4x288xf32>
      %167 = vector.broadcast %145 : vector<4x1xf32> to vector<4x288xf32>
      %168 = arith.subf %166, %167 : vector<4x288xf32>
      %169 = vector.broadcast %116 : vector<1x288xf32> to vector<4x288xf32>
      %170 = arith.mulf %168, %169 : vector<4x288xf32>
      %171 = arith.mulf %170, %170 : vector<4x288xf32>
      %cst_160 = arith.constant dense<0.000000e+00> : vector<4xf32>
      %172 = vector.multi_reduction <add>, %171, %cst_160 [1] : vector<4x288xf32> to vector<4xf32>
      %173 = vector.shape_cast %172 : vector<4xf32> to vector<4x1xf32>
      %174 = arith.addf %164, %173 : vector<4x1xf32>
      %c3_161 = arith.constant 3 : index
      %c0_162 = arith.constant 0 : index
      %c0_163 = arith.constant 0 : index
      %175 = vector.load %arg6[%c3_161, %c0_162, %c0_163] : memref<4x4x288xf32, #tpu.memory_space<vmem>>, vector<1x4x288xf32>
      %176 = vector.shape_cast %175 : vector<1x4x288xf32> to vector<4x288xf32>
      %177 = vector.broadcast %145 : vector<4x1xf32> to vector<4x288xf32>
      %178 = arith.subf %176, %177 : vector<4x288xf32>
      %179 = vector.broadcast %116 : vector<1x288xf32> to vector<4x288xf32>
      %180 = arith.mulf %178, %179 : vector<4x288xf32>
      %181 = arith.mulf %180, %180 : vector<4x288xf32>
      %cst_164 = arith.constant dense<0.000000e+00> : vector<4xf32>
      %182 = vector.multi_reduction <add>, %181, %cst_164 [1] : vector<4x288xf32> to vector<4xf32>
      %183 = vector.shape_cast %182 : vector<4xf32> to vector<4x1xf32>
      %184 = arith.addf %174, %183 : vector<4x1xf32>
      %cst_165 = arith.constant 9.765625E-4 : f32
      %185 = vector.broadcast %cst_165 : f32 to vector<4x1xf32>
      %186 = arith.mulf %184, %185 : vector<4x1xf32>
      %cst_166 = arith.constant 9.99999974E-6 : f32
      %187 = vector.broadcast %cst_166 : f32 to vector<4x1xf32>
      %188 = arith.addf %186, %187 : vector<4x1xf32>
      %189 = math.rsqrt %188 : vector<4x1xf32>
      %c0_167 = arith.constant 0 : index
      %c0_168 = arith.constant 0 : index
      %c0_169 = arith.constant 0 : index
      %190 = vector.load %arg6[%c0_167, %c0_168, %c0_169] : memref<4x4x288xf32, #tpu.memory_space<vmem>>, vector<1x4x288xf32>
      %191 = vector.shape_cast %190 : vector<1x4x288xf32> to vector<4x288xf32>
      %192 = vector.broadcast %145 : vector<4x1xf32> to vector<4x288xf32>
      %193 = arith.subf %191, %192 : vector<4x288xf32>
      %194 = vector.broadcast %189 : vector<4x1xf32> to vector<4x288xf32>
      %195 = arith.mulf %193, %194 : vector<4x288xf32>
      %cst_170 = arith.constant 0.000000e+00 : f32
      %196 = vector.broadcast %cst_170 : f32 to vector<4x288xf32>
      %197 = arith.cmpf ogt, %195, %196 : vector<4x288xf32>
      %cst_171 = arith.constant 2.000000e-01 : f32
      %198 = vector.broadcast %cst_171 : f32 to vector<4x288xf32>
      %199 = arith.mulf %198, %195 : vector<4x288xf32>
      %200 = arith.select %197, %195, %199 : vector<4x288xi1>, vector<4x288xf32>
      %201 = arith.truncf %200 : vector<4x288xf32> to vector<4x288xbf16>
      %c0_172 = arith.constant 0 : index
      %c0_173 = arith.constant 0 : index
      %c0_174 = arith.constant 0 : index
      %c0_175 = arith.constant 0 : index
      %202 = vector.load %arg5[%c0_172, %c0_173, %c0_174, %c0_175] : memref<1x4x4x288xbf16, #tpu.memory_space<vmem>>, vector<1x1x4x288xbf16>
      %203 = vector.shape_cast %202 : vector<1x1x4x288xbf16> to vector<4x288xbf16>
      %204 = vector.shape_cast %201 : vector<4x288xbf16> to vector<1x1x4x288xbf16>
      tpu.vector_store %arg5[%c0_172, %c0_173, %c0_174, %c0_175], %204 {strides = array<i32>} : memref<1x4x4x288xbf16, #tpu.memory_space<vmem>>, vector<1x1x4x288xbf16>,
      %c1_176 = arith.constant 1 : index
      %c0_177 = arith.constant 0 : index
      %c0_178 = arith.constant 0 : index
      %205 = vector.load %arg6[%c1_176, %c0_177, %c0_178] : memref<4x4x288xf32, #tpu.memory_space<vmem>>, vector<1x4x288xf32>
      %206 = vector.shape_cast %205 : vector<1x4x288xf32> to vector<4x288xf32>
      %207 = vector.broadcast %145 : vector<4x1xf32> to vector<4x288xf32>
      %208 = arith.subf %206, %207 : vector<4x288xf32>
      %209 = vector.broadcast %189 : vector<4x1xf32> to vector<4x288xf32>
      %210 = arith.mulf %208, %209 : vector<4x288xf32>
      %cst_179 = arith.constant 0.000000e+00 : f32
      %211 = vector.broadcast %cst_179 : f32 to vector<4x288xf32>
      %212 = arith.cmpf ogt, %210, %211 : vector<4x288xf32>
      %cst_180 = arith.constant 2.000000e-01 : f32
      %213 = vector.broadcast %cst_180 : f32 to vector<4x288xf32>
      %214 = arith.mulf %213, %210 : vector<4x288xf32>
      %215 = arith.select %212, %210, %214 : vector<4x288xi1>, vector<4x288xf32>
      %216 = arith.truncf %215 : vector<4x288xf32> to vector<4x288xbf16>
      %c0_181 = arith.constant 0 : index
      %c1_182 = arith.constant 1 : index
      %c0_183 = arith.constant 0 : index
      %c0_184 = arith.constant 0 : index
      %217 = vector.load %arg5[%c0_181, %c1_182, %c0_183, %c0_184] : memref<1x4x4x288xbf16, #tpu.memory_space<vmem>>, vector<1x1x4x288xbf16>
      %218 = vector.shape_cast %217 : vector<1x1x4x288xbf16> to vector<4x288xbf16>
      %219 = vector.shape_cast %216 : vector<4x288xbf16> to vector<1x1x4x288xbf16>
      tpu.vector_store %arg5[%c0_181, %c1_182, %c0_183, %c0_184], %219 {strides = array<i32>} : memref<1x4x4x288xbf16, #tpu.memory_space<vmem>>, vector<1x1x4x288xbf16>,
      %c2_185 = arith.constant 2 : index
      %c0_186 = arith.constant 0 : index
      %c0_187 = arith.constant 0 : index
      %220 = vector.load %arg6[%c2_185, %c0_186, %c0_187] : memref<4x4x288xf32, #tpu.memory_space<vmem>>, vector<1x4x288xf32>
      %221 = vector.shape_cast %220 : vector<1x4x288xf32> to vector<4x288xf32>
      %222 = vector.broadcast %145 : vector<4x1xf32> to vector<4x288xf32>
      %223 = arith.subf %221, %222 : vector<4x288xf32>
      %224 = vector.broadcast %189 : vector<4x1xf32> to vector<4x288xf32>
      %225 = arith.mulf %223, %224 : vector<4x288xf32>
      %cst_188 = arith.constant 0.000000e+00 : f32
      %226 = vector.broadcast %cst_188 : f32 to vector<4x288xf32>
      %227 = arith.cmpf ogt, %225, %226 : vector<4x288xf32>
      %cst_189 = arith.constant 2.000000e-01 : f32
      %228 = vector.broadcast %cst_189 : f32 to vector<4x288xf32>
      %229 = arith.mulf %228, %225 : vector<4x288xf32>
      %230 = arith.select %227, %225, %229 : vector<4x288xi1>, vector<4x288xf32>
      %231 = arith.truncf %230 : vector<4x288xf32> to vector<4x288xbf16>
      %c0_190 = arith.constant 0 : index
      %c2_191 = arith.constant 2 : index
      %c0_192 = arith.constant 0 : index
      %c0_193 = arith.constant 0 : index
      %232 = vector.load %arg5[%c0_190, %c2_191, %c0_192, %c0_193] : memref<1x4x4x288xbf16, #tpu.memory_space<vmem>>, vector<1x1x4x288xbf16>
      %233 = vector.shape_cast %232 : vector<1x1x4x288xbf16> to vector<4x288xbf16>
      %234 = vector.shape_cast %231 : vector<4x288xbf16> to vector<1x1x4x288xbf16>
      tpu.vector_store %arg5[%c0_190, %c2_191, %c0_192, %c0_193], %234 {strides = array<i32>} : memref<1x4x4x288xbf16, #tpu.memory_space<vmem>>, vector<1x1x4x288xbf16>,
      %c3_194 = arith.constant 3 : index
      %c0_195 = arith.constant 0 : index
      %c0_196 = arith.constant 0 : index
      %235 = vector.load %arg6[%c3_194, %c0_195, %c0_196] : memref<4x4x288xf32, #tpu.memory_space<vmem>>, vector<1x4x288xf32>
      %236 = vector.shape_cast %235 : vector<1x4x288xf32> to vector<4x288xf32>
      %237 = vector.broadcast %145 : vector<4x1xf32> to vector<4x288xf32>
      %238 = arith.subf %236, %237 : vector<4x288xf32>
      %239 = vector.broadcast %189 : vector<4x1xf32> to vector<4x288xf32>
      %240 = arith.mulf %238, %239 : vector<4x288xf32>
      %cst_197 = arith.constant 0.000000e+00 : f32
      %241 = vector.broadcast %cst_197 : f32 to vector<4x288xf32>
      %242 = arith.cmpf ogt, %240, %241 : vector<4x288xf32>
      %cst_198 = arith.constant 2.000000e-01 : f32
      %243 = vector.broadcast %cst_198 : f32 to vector<4x288xf32>
      %244 = arith.mulf %243, %240 : vector<4x288xf32>
      %245 = arith.select %242, %240, %244 : vector<4x288xi1>, vector<4x288xf32>
      %246 = arith.truncf %245 : vector<4x288xf32> to vector<4x288xbf16>
      %c0_199 = arith.constant 0 : index
      %c3_200 = arith.constant 3 : index
      %c0_201 = arith.constant 0 : index
      %c0_202 = arith.constant 0 : index
      %247 = vector.load %arg5[%c0_199, %c3_200, %c0_201, %c0_202] : memref<1x4x4x288xbf16, #tpu.memory_space<vmem>>, vector<1x1x4x288xbf16>
      %248 = vector.shape_cast %247 : vector<1x1x4x288xbf16> to vector<4x288xbf16>
      %249 = vector.shape_cast %246 : vector<4x288xbf16> to vector<1x1x4x288xbf16>
      tpu.vector_store %arg5[%c0_199, %c3_200, %c0_201, %c0_202], %249 {strides = array<i32>} : memref<1x4x4x288xbf16, #tpu.memory_space<vmem>>, vector<1x1x4x288xbf16>,
    } else {
    }
    return
  }
  func.func @transform_0(%arg0: i32, %arg1: i32) -> (i32, i32) {
    %c0_i32 = arith.constant 0 : i32
    %c0_i32_0 = arith.constant 0 : i32
    %c0_i32_1 = arith.constant 0 : i32
    return %c0_i32, %c0_i32_0 : i32, i32
  }
  func.func @transform_1(%arg0: i32, %arg1: i32) -> (i32, i32, i32) {
    %c0_i32 = arith.constant 0 : i32
    %c0_i32_0 = arith.constant 0 : i32
    return %arg0, %arg1, %c0_i32 : i32, i32, i32
  }
  func.func @transform_2(%arg0: i32, %arg1: i32) -> (i32, i32, i32, i32) {
    %c0_i32 = arith.constant 0 : i32
    %c0_i32_0 = arith.constant 0 : i32
    %c0_i32_1 = arith.constant 0 : i32
    %c0_i32_2 = arith.constant 0 : i32
    return %c0_i32, %c0_i32_0, %c0_i32_1, %arg1 : i32, i32, i32, i32
  }
  func.func @transform_3(%arg0: i32, %arg1: i32) -> (i32, i32, i32, i32) {
    %c0_i32 = arith.constant 0 : i32
    %c0_i32_0 = arith.constant 0 : i32
    %c0_i32_1 = arith.constant 0 : i32
    %c0_i32_2 = arith.constant 0 : i32
    return %arg0, %c0_i32, %c0_i32_0, %c0_i32_1 : i32, i32, i32, i32
  }
}

</mosaic_0001>

<llo_original>
// kernel: unet_up_forward.1
$region0: #{unet_up_forward.1}
  #allocation0 [shape = 'u32[]', space=smem, size = 0x4, offset = 0x4, fixed_abs, tag = 'smem constant byte address 0x4 - core index']
  #allocation1 [shape = 'u32[72,128]{1,0:T(1,128)}', space=vmem, size = 0x9000, scoped, tag = 'internal scratch']
  #allocation2 [shape = 'f32[4,4,288]{2,1,0:T(4,128)}', space=vmem, size = 0x6000, scoped, tag = 'scratch operand']
  %s0 = inlined_call_operand.vmem [shape: f32[1,288], index: 0, kind: input, shape index: {}]
  %s1 = inlined_call_operand.vmem [shape: bf16[2,8,342], index: 1, kind: input, shape index: {}]
  %s2 = inlined_call_operand.vmem [shape: bf16[4,4,4,8], index: 2, kind: input, shape index: {}]
  %s3 = inlined_call_operand.vmem [shape: bf16[2,4,4,288], index: 3, kind: output, shape index: {}]
  %s4 = sld [smem:[#allocation0]]
  $region81: #{unet_up_forward.1} parent=0
    _
  %s6 = ssub.s32 1, %s4
  %s7 = scalar_select 0, %s6, %s4
  loop: start=0, step=1, limit=4
  $region2: #{unet_up_forward.1} parent=0 // loop_pre_header
    _
  $region3: #{unet_up_forward.1} parent=0 // loop_header
    %s9 = sphi 0, %s13
    %p10 = scmp.ge.s32.totalorder %s9, 4
    %s16 = sphi 0, %s28
    %s17 = sphi 0, %s24
    %s18 = sphi 0, %s16
    %s19 = sphi 0, %s17
    %s20 = sphi 0, %s18
    %s21 = sphi 0, %s19
    %s29 = sphi 0, %s29
    %s31 = sphi 0, %s29
    %s32 = sphi 0, %s31
    %s46 = sphi 0, %s32
    %s54 = sphi 0, %s56
    %s57 = sphi 0, %s54
    %s58 = sphi 0, %s57
    %s74 = sphi 0, %s58
    %s80 = sphi 0, %s82
    %s83 = sphi 0, %s80
    %s84 = sphi 0, %s83
    %s100 = sphi 0, %s84
    %s106 = sphi 0, %s108
    %s109 = sphi 0, %s106
    %s110 = sphi 0, %s109
    %s126 = sphi 0, %s110
  $region4: #{unet_up_forward.1} parent=0 // loop_header_branch
    %12 = sbr.rel (%p10) target = $region8
  $region5: #{unet_up_forward.1} parent=0 // loop_body
    %s14 = ssub.s32 %s9, 1
    %s15 = ssub.s32 %s9, 2
    %s22 = sadd.s32 1, %s17
    %p23 = scmp.ge.s32.totalorder %s22, 1
    %s24 = scalar_select %p23, 0, %s22
    %s25 = sadd.s32 1, %s16
    %s26 = scalar_select %p23, %s25, %s16
    %p27 = scmp.ge.s32.totalorder %s26, 2
    %s28 = scalar_select %p27, 0, %s26
    %s30 = sadd.s32 %s29, 1
    %p33 = scmp.eq.s32.totalorder %s9, 1
    %p34 = scmp.ne.s32.totalorder %s29, %s31
    %p35 = scmp.eq.s32.totalorder %s9, 0
    %p36 = por %p34, %p35
    %p37 = scmp.ne.s32.totalorder %s29, %s31
    %p38 = scmp.eq.s32.totalorder %s14, 1
    %p39 = por %p37, %p38
    %p40 = scmp.ne.s32.totalorder %s31, %s32
    %p41 = scmp.eq.s32.totalorder %s14, 0
    %p42 = por %p40, %p41
    %p43 = scmp.ne.s32.totalorder %s31, %s32
    %p44 = scmp.eq.s32.totalorder %s15, 1
    %p45 = por %p43, %p44
    %p47 = scmp.ne.s32.totalorder %s32, %s46
    %p48 = scmp.eq.s32.totalorder %s15, 0
    %p49 = por %p47, %p48
    %s50 = ssub.s32 %s16, %s28
    %s51 = ssub.s32 %s17, %s24
    %s52 = sor.u32 %s50, %s51
    %p53 = scmp.eq.s32.totalorder %s52, 0
    %s55 = sadd.s32 %s54, 1
    %s56 = scalar_select %p53, %s54, %s55
    %p59 = pneg %p53
    %p60 = scmp.eq.s32.totalorder %s9, 1
    %p61 = por %p59, %p60
    %p62 = scmp.ne.s32.totalorder %s54, %s57
    %p63 = scmp.eq.s32.totalorder %s9, 0
    %p64 = por %p62, %p63
    %p65 = scmp.ne.s32.totalorder %s54, %s57
    %p66 = scmp.eq.s32.totalorder %s14, 1
    %p67 = por %p65, %p66
    %p68 = scmp.ne.s32.totalorder %s57, %s58
    %p69 = scmp.eq.s32.totalorder %s14, 0
    %p70 = por %p68, %p69
    %p71 = scmp.ne.s32.totalorder %s57, %s58
    %p72 = scmp.eq.s32.totalorder %s15, 1
    %p73 = por %p71, %p72
    %p75 = scmp.ne.s32.totalorder %s58, %s74
    %p76 = scmp.eq.s32.totalorder %s15, 0
    %p77 = por %p75, %p76
    %s78 = ssub.s32 %s17, %s24
    %p79 = scmp.eq.s32.totalorder %s78, 0
    %s81 = sadd.s32 %s80, 1
    %s82 = scalar_select %p79, %s80, %s81
    %p85 = pneg %p79
    %p86 = scmp.eq.s32.totalorder %s9, 1
    %p87 = por %p85, %p86
    %p88 = scmp.ne.s32.totalorder %s80, %s83
    %p89 = scmp.eq.s32.totalorder %s9, 0
    %p90 = por %p88, %p89
    %p91 = scmp.ne.s32.totalorder %s80, %s83
    %p92 = scmp.eq.s32.totalorder %s14, 1
    %p93 = por %p91, %p92
    %p94 = scmp.ne.s32.totalorder %s83, %s84
    %p95 = scmp.eq.s32.totalorder %s14, 0
    %p96 = por %p94, %p95
    %p97 = scmp.ne.s32.totalorder %s83, %s84
    %p98 = scmp.eq.s32.totalorder %s15, 1
    %p99 = por %p97, %p98
    %p101 = scmp.ne.s32.totalorder %s84, %s100
    %p102 = scmp.eq.s32.totalorder %s15, 0
    %p103 = por %p101, %p102
    %s104 = ssub.s32 %s16, %s28
    %p105 = scmp.eq.s32.totalorder %s104, 0
    %s107 = sadd.s32 %s106, 1
    %s108 = scalar_select %p105, %s106, %s107
    %p111 = pneg %p105
    %p112 = scmp.eq.s32.totalorder %s9, 1
    %p113 = por %p111, %p112
    %p114 = scmp.ne.s32.totalorder %s106, %s109
    %p115 = scmp.eq.s32.totalorder %s9, 0
    %p116 = por %p114, %p115
    %p117 = scmp.ne.s32.totalorder %s106, %s109
    %p118 = scmp.eq.s32.totalorder %s14, 1
    %p119 = por %p117, %p118
    %p120 = scmp.ne.s32.totalorder %s109, %s110
    %p121 = scmp.eq.s32.totalorder %s14, 0
    %p122 = por %p120, %p121
    %p123 = scmp.ne.s32.totalorder %s109, %s110
    %p124 = scmp.eq.s32.totalorder %s15, 1
    %p125 = por %p123, %p124
    %p127 = scmp.ne.s32.totalorder %s110, %s126
    %p128 = scmp.eq.s32.totalorder %s15, 0
    %p129 = por %p127, %p128
    %p130 = scmp.le.s32.totalorder 1, %s9
    %p131 = scmp.lt.s32.totalorder %s9, 3
    %p132 = pnand %p130, %p131
    %p133 = pneg %p132
    // Predicated region
    $region9: #{unet_up_forward.1} parent=5 // pred_check
      _
    $region10: #{unet_up_forward.1} parent=5 // pred_check_branch
      %135 = sbr.rel (%p132) target = $region12
    $region11: #{unet_up_forward.1} parent=5 // pred_region
      %s136 = ssub.s32 %s9, 1
      // Predicated region
      $region13: #{unet_up_forward.1} parent=11 // pred_check
        %p137 = pneg %p42
      $region14: #{unet_up_forward.1} parent=11 // pred_check_branch
        %139 = sbr.rel (%p137) target = $region16
      $region15: #{unet_up_forward.1} parent=11 // pred_region
        _
      $region16: #{unet_up_forward.1} parent=11 // pred_fallthru
        _
      // Predicated region
      $region17: #{unet_up_forward.1} parent=11 // pred_check
        %p140 = pneg %p96
      $region18: #{unet_up_forward.1} parent=11 // pred_check_branch
        %142 = sbr.rel (%p140) target = $region20
      $region19: #{unet_up_forward.1} parent=11 // pred_region
        %p143 = scmp.lt.s32.totalorder %s19, 0
        %s144 = scalar_select %p143, %s19, 0
        %s145 = smul.addr %s144, 2
        %s146 = scalar_lea.vmem %s2, %s145
      $region20: #{unet_up_forward.1} parent=11 // pred_fallthru
        _
    $region12: #{unet_up_forward.1} parent=5 // pred_fallthru
      _
    %p147 = scmp.lt.s32.totalorder %s9, 2
    // Predicated region
    $region21: #{unet_up_forward.1} parent=5 // pred_check
      %p148 = pneg %p147
    $region22: #{unet_up_forward.1} parent=5 // pred_check_branch
      %150 = sbr.rel (%p148) target = $region24
    $region23: #{unet_up_forward.1} parent=5 // pred_region
      // Predicated region
      $region25: #{unet_up_forward.1} parent=23 // pred_check
        %p151 = pneg %p64
      $region26: #{unet_up_forward.1} parent=23 // pred_check_branch
        %153 = sbr.rel (%p151) target = $region28
      $region27: #{unet_up_forward.1} parent=23 // pred_region
        %p154 = scmp.lt.s32.totalorder %s16, 1
        %s155 = scalar_select %p154, %s16, 1
        %p156 = scmp.lt.s32.totalorder %s17, 0
        %s157 = scalar_select %p156, %s17, 0
        %s158 = smul.addr %s157, 3
        %s159 = smul.addr %s155, 3
        %s160 = sadd.s32 %s158, %s159
        %s161 = smul.addr %s160, 4
        %s162 = scalar_lea.vmem %s1, %s161
      $region28: #{unet_up_forward.1} parent=23 // pred_fallthru
        _
    $region24: #{unet_up_forward.1} parent=5 // pred_fallthru
      _
    %p163 = scmp.le.s32.totalorder 1, %s9
    %p164 = scmp.lt.s32.totalorder %s9, 3
    %p165 = pnand %p163, %p164
    %p166 = pneg %p165
    // Predicated region
    $region29: #{unet_up_forward.1} parent=5 // pred_check
      _
    $region30: #{unet_up_forward.1} parent=5 // pred_check_branch
      %168 = sbr.rel (%p165) target = $region32
    $region31: #{unet_up_forward.1} parent=5 // pred_region
      %s169 = ssub.s32 %s9, 1
      %p170 = pneg %p42
      %p171 = pneg %p39
      %p172 = scmp.lt.s32.totalorder %s18, 1
      %s173 = scalar_select %p172, %s18, 1
      %p174 = scmp.lt.s32.totalorder %s19, 0
      %s175 = scalar_select %p174, %s19, 0
      %s176 = smul.addr %s175, 3
      %s177 = smul.addr %s173, 3
      %s178 = sadd.s32 %s176, %s177
      %s179 = smul.addr %s178, 4
      %s180 = scalar_lea.vmem %s1, %s179
      %p181 = pneg %p70
      %p182 = pneg %p67
      %p183 = scmp.lt.s32.totalorder %s19, 0
      %s184 = scalar_select %p183, %s19, 0
      %s185 = smul.addr %s184, 2
      %s186 = scalar_lea.vmem %s2, %s185
      %p187 = pneg %p96
      %p188 = pneg %p93
      %p189 = pneg %p122
      %p190 = pneg %p119
      %p191 = scmp.lt.s32.totalorder %s18, 1
      %s192 = scalar_select %p191, %s18, 1
      %s193 = smul.addr %s192, 12
      %s194 = smul.addr %s193, 2
      %s195 = scalar_lea.vmem %s3, %s194
      %p196 = scmp.lt.s32.totalorder %s18, 1
      %s197 = scalar_select %p196, %s18, 1
      %p198 = scmp.lt.s32.totalorder %s19, 0
      %s199 = scalar_select %p198, %s19, 0
      %s200 = smul.addr %s199, 3
      %s201 = smul.addr %s197, 3
      %s202 = sadd.s32 %s200, %s201
      %s203 = smul.addr %s202, 4
      %s204 = scalar_lea.vmem %s1, %s203
      %p205 = scmp.lt.s32.totalorder %s19, 0
      %s206 = scalar_select %p205, %s19, 0
      %s207 = smul.addr %s206, 2
      %s208 = scalar_lea.vmem %s2, %s207
      %p209 = scmp.lt.s32.totalorder %s18, 1
      %s210 = scalar_select %p209, %s18, 1
      %s211 = smul.addr %s210, 12
      %s212 = smul.addr %s211, 2
      %s213 = scalar_lea.vmem %s3, %s212
      %p215 = scmp.eq.s32.totalorder %s19, 0
      %v216 = vld [vmem:[%s204] sm:$0xff]
      %v217 = vld [vmem:[%s204 + $0x8] sm:$0xf]
      %v218 = vld [vmem:[%s208] sm:$0x3]
      %s219 = scalar_lea.vmem %s208, 2
      %v220 = vld [vmem:[%s219] sm:$0x3]
      %v223 = vunpack.c.l.b16 %v216
      %v224 = vunpack.c.h.b16 %v216
      %v225 = vunpack.c.l.b16 %v217
      %v226 = vpack.c.b16 %v223, %v223
      %v227 = vpack.c.b16 %v224, %v224
      %v228 = vpack.c.b16 %v225, %v225
      %229 = vrot.lane.b32.xlu0 %v226, 127
      %v230 = vpop.permute.xlu0 %229
      %231 = vrot.lane.b32.xlu0 %v227, 127
      %v232 = vpop.permute.xlu0 %231
      %233 = vrot.lane.b32.xlu0 %v228, 127
      %v234 = vpop.permute.xlu0 %233
      %vm235 = vcmask 1039360
      %v236 = vsel %vm235, %v230, %v232
      %v237 = vsel %vm235, %v232, %v234
      %vm238 = vcmask 64512
      %v240 = vsel %vm238, %v220, 0
      %vm242 = vcmask 1043456
      %v244 = vsel %vm242, %v236, 0
      %v247 = vsel %vm242, %v237, 0
      %v250 = vsel %vm242, %v234, 0
      %252 = vmatpush.bf16.msra.mxu0 0
      %253 = vmatpush.bf16.msra.mxu0 0
      %254 = vmatpush.bf16.msra.mxu0 0
      %255 = vmatpush.bf16.msra.mxu0 0
      %256 = vmatpush.bf16.msra.mxu0 0
      %257 = vmatpush.bf16.msra.mxu0 0
      %258 = vmatpush.bf16.msra.mxu0 0
      %259 = vmatpush.bf16.msra.mxu0 %v244
      %260 = vmatmul.bf16.gmra.mxu0 %v240
      %v261 = vpop.f32.mrf.mxu0
      %v262 = vadd.f32 0.0, %v261
      %v263 = vpop.f32.mrf.mxu0
      %264 = vdwg.mxu0
      %265 = vmatpush.bf16.msra.mxu0 0
      %266 = vmatpush.bf16.msra.mxu0 0
      %267 = vmatpush.bf16.msra.mxu0 0
      %268 = vmatpush.bf16.msra.mxu0 0
      %269 = vmatpush.bf16.msra.mxu0 0
      %270 = vmatpush.bf16.msra.mxu0 0
      %271 = vmatpush.bf16.msra.mxu0 0
      %272 = vmatpush.bf16.msra.mxu0 %v247
      %273 = vmatmul.bf16.gmra.mxu0 %v240
      %v274 = vpop.f32.mrf.mxu0
      %v275 = vadd.f32 0.0, %v274
      %v276 = vpop.f32.mrf.mxu0
      %277 = vdwg.mxu0
      %278 = vmatpush.bf16.msra.mxu0 0
      %279 = vmatpush.bf16.msra.mxu0 0
      %280 = vmatpush.bf16.msra.mxu0 0
      %281 = vmatpush.bf16.msra.mxu0 0
      %282 = vmatpush.bf16.msra.mxu0 0
      %283 = vmatpush.bf16.msra.mxu0 0
      %284 = vmatpush.bf16.msra.mxu0 0
      %285 = vmatpush.bf16.msra.mxu0 %v250
      %286 = vmatmul.bf16.gmra.mxu0 %v240
      %v287 = vpop.f32.mrf.mxu0
      %v288 = vadd.f32 0.0, %v287
      %v289 = vpop.f32.mrf.mxu0
      %290 = vdwg.mxu0
      %v292 = vsel %vm238, %v218, 0
      %v295 = vsel %vm242, %v226, 0
      %v298 = vsel %vm242, %v227, 0
      %v301 = vsel %vm242, %v228, 0
      %303 = vmatpush.bf16.msra.mxu0 0
      %304 = vmatpush.bf16.msra.mxu0 0
      %305 = vmatpush.bf16.msra.mxu0 0
      %306 = vmatpush.bf16.msra.mxu0 0
      %307 = vmatpush.bf16.msra.mxu0 0
      %308 = vmatpush.bf16.msra.mxu0 0
      %309 = vmatpush.bf16.msra.mxu0 0
      %310 = vmatpush.bf16.msra.mxu0 %v295
      %311 = vmatmul.bf16.gmra.mxu0 %v292
      %v312 = vpop.f32.mrf.mxu0
      %v313 = vadd.f32 %v262, %v312
      %v314 = vpop.f32.mrf.mxu0
      %315 = vdwg.mxu0
      %316 = vmatpush.bf16.msra.mxu0 0
      %317 = vmatpush.bf16.msra.mxu0 0
      %318 = vmatpush.bf16.msra.mxu0 0
      %319 = vmatpush.bf16.msra.mxu0 0
      %320 = vmatpush.bf16.msra.mxu0 0
      %321 = vmatpush.bf16.msra.mxu0 0
      %322 = vmatpush.bf16.msra.mxu0 0
      %323 = vmatpush.bf16.msra.mxu0 %v298
      %324 = vmatmul.bf16.gmra.mxu0 %v292
      %v325 = vpop.f32.mrf.mxu0
      %v326 = vadd.f32 %v275, %v325
      %v327 = vpop.f32.mrf.mxu0
      %328 = vdwg.mxu0
      %329 = vmatpush.bf16.msra.mxu0 0
      %330 = vmatpush.bf16.msra.mxu0 0
      %331 = vmatpush.bf16.msra.mxu0 0
      %332 = vmatpush.bf16.msra.mxu0 0
      %333 = vmatpush.bf16.msra.mxu0 0
      %334 = vmatpush.bf16.msra.mxu0 0
      %335 = vmatpush.bf16.msra.mxu0 0
      %336 = vmatpush.bf16.msra.mxu0 %v301
      %337 = vmatmul.bf16.gmra.mxu0 %v292
      %v338 = vpop.f32.mrf.mxu0
      %v339 = vadd.f32 %v288, %v338
      %v340 = vpop.f32.mrf.mxu0
      %341 = vdwg.mxu0
      %s342 = scalar_lea.vmem %s208, 4
      %v343 = vld [vmem:[%s342] sm:$0x3]
      %344 = vrot.lane.b32.xlu0 %v226, 110
      %v345 = vpop.permute.xlu0 %344
      %346 = vrot.lane.b32.xlu0 %v227, 110
      %v347 = vpop.permute.xlu0 %346
      %348 = vrot.lane.b32.xlu0 %v228, 110
      %v349 = vpop.permute.xlu0 %348
      %vm350 = vcmask 900096
      %v351 = vsel %vm350, %v345, %v347
      %v352 = vsel %vm350, %v347, %v349
      %v354 = vsel %vm238, %v343, 0
      %v357 = vsel %vm242, %v351, 0
      %v360 = vsel %vm242, %v352, 0
      %v363 = vsel %vm242, %v349, 0
      %365 = vmatpush.bf16.msra.mxu0 0
      %366 = vmatpush.bf16.msra.mxu0 0
      %367 = vmatpush.bf16.msra.mxu0 0
      %368 = vmatpush.bf16.msra.mxu0 0
      %369 = vmatpush.bf16.msra.mxu0 0
      %370 = vmatpush.bf16.msra.mxu0 0
      %371 = vmatpush.bf16.msra.mxu0 0
      %372 = vmatpush.bf16.msra.mxu0 %v357
      %373 = vmatmul.bf16.gmra.mxu0 %v354
      %v374 = vpop.f32.mrf.mxu0
      %v375 = vadd.f32 0.0, %v374
      %v376 = vpop.f32.mrf.mxu0
      %377 = vdwg.mxu0
      %378 = vmatpush.bf16.msra.mxu0 0
      %379 = vmatpush.bf16.msra.mxu0 0
      %380 = vmatpush.bf16.msra.mxu0 0
      %381 = vmatpush.bf16.msra.mxu0 0
      %382 = vmatpush.bf16.msra.mxu0 0
      %383 = vmatpush.bf16.msra.mxu0 0
      %384 = vmatpush.bf16.msra.mxu0 0
      %385 = vmatpush.bf16.msra.mxu0 %v360
      %386 = vmatmul.bf16.gmra.mxu0 %v354
      %v387 = vpop.f32.mrf.mxu0
      %v388 = vadd.f32 0.0, %v387
      %v389 = vpop.f32.mrf.mxu0
      %390 = vdwg.mxu0
      %391 = vmatpush.bf16.msra.mxu0 0
      %392 = vmatpush.bf16.msra.mxu0 0
      %393 = vmatpush.bf16.msra.mxu0 0
      %394 = vmatpush.bf16.msra.mxu0 0
      %395 = vmatpush.bf16.msra.mxu0 0
      %396 = vmatpush.bf16.msra.mxu0 0
      %397 = vmatpush.bf16.msra.mxu0 0
      %398 = vmatpush.bf16.msra.mxu0 %v363
      %399 = vmatmul.bf16.gmra.mxu0 %v354
      %v400 = vpop.f32.mrf.mxu0
      %v401 = vadd.f32 0.0, %v400
      %v402 = vpop.f32.mrf.mxu0
      %403 = vdwg.mxu0
      %v404 = vadd.f32 %v313, %v375
      %v405 = vadd.f32 %v326, %v388
      %v406 = vadd.f32 %v339, %v401
      %s407 = scalar_lea.vmem %s208, 6
      %v408 = vld [vmem:[%s407] sm:$0x3]
      %409 = vrot.lane.b32.xlu0 %v226, 109
      %v410 = vpop.permute.xlu0 %409
      %411 = vrot.lane.b32.xlu0 %v227, 109
      %v412 = vpop.permute.xlu0 %411
      %413 = vrot.lane.b32.xlu0 %v228, 109
      %v414 = vpop.permute.xlu0 %413
      %vm415 = vcmask 891904
      %v416 = vsel %vm415, %v410, %v412
      %v417 = vsel %vm415, %v412, %v414
      %v419 = vsel %vm238, %v408, 0
      %v422 = vsel %vm242, %v416, 0
      %v425 = vsel %vm242, %v417, 0
      %v428 = vsel %vm242, %v414, 0
      %430 = vmatpush.bf16.msra.mxu0 0
      %431 = vmatpush.bf16.msra.mxu0 0
      %432 = vmatpush.bf16.msra.mxu0 0
      %433 = vmatpush.bf16.msra.mxu0 0
      %434 = vmatpush.bf16.msra.mxu0 0
      %435 = vmatpush.bf16.msra.mxu0 0
      %436 = vmatpush.bf16.msra.mxu0 0
      %437 = vmatpush.bf16.msra.mxu0 %v422
      %438 = vmatmul.bf16.gmra.mxu0 %v419
      %v439 = vpop.f32.mrf.mxu0
      %v440 = vadd.f32 0.0, %v439
      %v441 = vpop.f32.mrf.mxu0
      %442 = vdwg.mxu0
      %443 = vmatpush.bf16.msra.mxu0 0
      %444 = vmatpush.bf16.msra.mxu0 0
      %445 = vmatpush.bf16.msra.mxu0 0
      %446 = vmatpush.bf16.msra.mxu0 0
      %447 = vmatpush.bf16.msra.mxu0 0
      %448 = vmatpush.bf16.msra.mxu0 0
      %449 = vmatpush.bf16.msra.mxu0 0
      %450 = vmatpush.bf16.msra.mxu0 %v425
      %451 = vmatmul.bf16.gmra.mxu0 %v419
      %v452 = vpop.f32.mrf.mxu0
      %v453 = vadd.f32 0.0, %v452
      %v454 = vpop.f32.mrf.mxu0
      %455 = vdwg.mxu0
      %456 = vmatpush.bf16.msra.mxu0 0
      %457 = vmatpush.bf16.msra.mxu0 0
      %458 = vmatpush.bf16.msra.mxu0 0
      %459 = vmatpush.bf16.msra.mxu0 0
      %460 = vmatpush.bf16.msra.mxu0 0
      %461 = vmatpush.bf16.msra.mxu0 0
      %462 = vmatpush.bf16.msra.mxu0 0
      %463 = vmatpush.bf16.msra.mxu0 %v428
      %464 = vmatmul.bf16.gmra.mxu0 %v419
      %v465 = vpop.f32.mrf.mxu0
      %v466 = vadd.f32 0.0, %v465
      %v467 = vpop.f32.mrf.mxu0
      %468 = vdwg.mxu0
      %v469 = vadd.f32 %v404, %v440
      %v470 = vadd.f32 %v405, %v453
      %v471 = vadd.f32 %v406, %v466
      // Predicated region
      $region33: #{unet_up_forward.1} parent=31 // pred_check
        %p472 = pneg %p215
      $region34: #{unet_up_forward.1} parent=31 // pred_check_branch
        %474 = sbr.rel (%p472) target = $region36
      $region35: #{unet_up_forward.1} parent=31 // pred_region
        %v477 = vrot.slane %v470, 4
        %v478 = vsel %vm242, %v469, %v477
        %480 = vst [vmem:[#allocation2] sm:$0xff] %v478
        %vm481 = vcmask 257024
        %482 = vst.msk [vmem:[#allocation2 + $0x8] sm:$0xf] %vm481, %v471
      $region36: #{unet_up_forward.1} parent=31 // pred_fallthru
        _
      %p483 = scmp.ne.s32.totalorder %s19, 0
      // Predicated region
      $region37: #{unet_up_forward.1} parent=31 // pred_check
        %p484 = pneg %p483
      $region38: #{unet_up_forward.1} parent=31 // pred_check_branch
        %486 = sbr.rel (%p484) target = $region40
      $region39: #{unet_up_forward.1} parent=31 // pred_region
        %v487 = vld [vmem:[#allocation2] sm:$0xff]
        %v488 = vld [vmem:[#allocation2 + $0x8] sm:$0xf]
        %v491 = vrot.slane %v470, 4
        %v492 = vsel %vm242, %v469, %v491
        %v494 = vadd.f32 %v487, %v492
        %v495 = vadd.f32 %v488, %v471
        %496 = vst [vmem:[#allocation2] sm:$0xff] %v494
        %vm497 = vcmask 257024
        %498 = vst.msk [vmem:[#allocation2 + $0x8] sm:$0xf] %vm497, %v495
      $region40: #{unet_up_forward.1} parent=31 // pred_fallthru
        _
      %v499 = vld [vmem:[%s204] sm:$0xff]
      %v500 = vld [vmem:[%s204 + $0x8] sm:$0xf]
      %s501 = scalar_lea.vmem %s208, 8
      %v502 = vld [vmem:[%s501] sm:$0x3]
      %s503 = scalar_lea.vmem %s208, 10
      %v504 = vld [vmem:[%s503] sm:$0x3]
      %v507 = vunpack.c.l.b16 %v499
      %v508 = vunpack.c.h.b16 %v499
      %v509 = vunpack.c.l.b16 %v500
      %v510 = vpack.c.b16 %v507, %v507
      %v511 = vpack.c.b16 %v508, %v508
      %v512 = vpack.c.b16 %v509, %v509
      %513 = vrot.lane.b32.xlu0 %v510, 126
      %v514 = vpop.permute.xlu0 %513
      %515 = vrot.lane.b32.xlu0 %v511, 126
      %v516 = vpop.permute.xlu0 %515
      %517 = vrot.lane.b32.xlu0 %v512, 126
      %v518 = vpop.permute.xlu0 %517
      %vm519 = vcmask 1031168
      %v520 = vsel %vm519, %v514, %v516
      %v521 = vsel %vm519, %v516, %v518
      %v523 = vsel %vm238, %v504, 0
      %v526 = vsel %vm242, %v520, 0
      %v529 = vsel %vm242, %v521, 0
      %v532 = vsel %vm242, %v518, 0
      %534 = vmatpush.bf16.msra.mxu0 0
      %535 = vmatpush.bf16.msra.mxu0 0
      %536 = vmatpush.bf16.msra.mxu0 0
      %537 = vmatpush.bf16.msra.mxu0 0
      %538 = vmatpush.bf16.msra.mxu0 0
      %539 = vmatpush.bf16.msra.mxu0 0
      %540 = vmatpush.bf16.msra.mxu0 0
      %541 = vmatpush.bf16.msra.mxu0 %v526
      %542 = vmatmul.bf16.gmra.mxu0 %v523
      %v543 = vpop.f32.mrf.mxu0
      %v544 = vadd.f32 0.0, %v543
      %v545 = vpop.f32.mrf.mxu0
      %546 = vdwg.mxu0
      %547 = vmatpush.bf16.msra.mxu0 0
      %548 = vmatpush.bf16.msra.mxu0 0
      %549 = vmatpush.bf16.msra.mxu0 0
      %550 = vmatpush.bf16.msra.mxu0 0
      %551 = vmatpush.bf16.msra.mxu0 0
      %552 = vmatpush.bf16.msra.mxu0 0
      %553 = vmatpush.bf16.msra.mxu0 0
      %554 = vmatpush.bf16.msra.mxu0 %v529
      %555 = vmatmul.bf16.gmra.mxu0 %v523
      %v556 = vpop.f32.mrf.mxu0
      %v557 = vadd.f32 0.0, %v556
      %v558 = vpop.f32.mrf.mxu0
      %559 = vdwg.mxu0
      %560 = vmatpush.bf16.msra.mxu0 0
      %561 = vmatpush.bf16.msra.mxu0 0
      %562 = vmatpush.bf16.msra.mxu0 0
      %563 = vmatpush.bf16.msra.mxu0 0
      %564 = vmatpush.bf16.msra.mxu0 0
      %565 = vmatpush.bf16.msra.mxu0 0
      %566 = vmatpush.bf16.msra.mxu0 0
      %567 = vmatpush.bf16.msra.mxu0 %v532
      %568 = vmatmul.bf16.gmra.mxu0 %v523
      %v569 = vpop.f32.mrf.mxu0
      %v570 = vadd.f32 0.0, %v569
      %v571 = vpop.f32.mrf.mxu0
      %572 = vdwg.mxu0
      %573 = vrot.lane.b32.xlu0 %v510, 127
      %v574 = vpop.permute.xlu0 %573
      %575 = vrot.lane.b32.xlu0 %v511, 127
      %v576 = vpop.permute.xlu0 %575
      %577 = vrot.lane.b32.xlu0 %v512, 127
      %v578 = vpop.permute.xlu0 %577
      %v579 = vsel %vm235, %v574, %v576
      %v580 = vsel %vm235, %v576, %v578
      %v582 = vsel %vm238, %v502, 0
      %v585 = vsel %vm242, %v579, 0
      %v588 = vsel %vm242, %v580, 0
      %v591 = vsel %vm242, %v578, 0
      %593 = vmatpush.bf16.msra.mxu0 0
      %594 = vmatpush.bf16.msra.mxu0 0
      %595 = vmatpush.bf16.msra.mxu0 0
      %596 = vmatpush.bf16.msra.mxu0 0
      %597 = vmatpush.bf16.msra.mxu0 0
      %598 = vmatpush.bf16.msra.mxu0 0
      %599 = vmatpush.bf16.msra.mxu0 0
      %600 = vmatpush.bf16.msra.mxu0 %v585
      %601 = vmatmul.bf16.gmra.mxu0 %v582
      %v602 = vpop.f32.mrf.mxu0
      %v603 = vadd.f32 %v544, %v602
      %v604 = vpop.f32.mrf.mxu0
      %605 = vdwg.mxu0
      %606 = vmatpush.bf16.msra.mxu0 0
      %607 = vmatpush.bf16.msra.mxu0 0
      %608 = vmatpush.bf16.msra.mxu0 0
      %609 = vmatpush.bf16.msra.mxu0 0
      %610 = vmatpush.bf16.msra.mxu0 0
      %611 = vmatpush.bf16.msra.mxu0 0
      %612 = vmatpush.bf16.msra.mxu0 0
      %613 = vmatpush.bf16.msra.mxu0 %v588
      %614 = vmatmul.bf16.gmra.mxu0 %v582
      %v615 = vpop.f32.mrf.mxu0
      %v616 = vadd.f32 %v557, %v615
      %v617 = vpop.f32.mrf.mxu0
      %618 = vdwg.mxu0
      %619 = vmatpush.bf16.msra.mxu0 0
      %620 = vmatpush.bf16.msra.mxu0 0
      %621 = vmatpush.bf16.msra.mxu0 0
      %622 = vmatpush.bf16.msra.mxu0 0
      %623 = vmatpush.bf16.msra.mxu0 0
      %624 = vmatpush.bf16.msra.mxu0 0
      %625 = vmatpush.bf16.msra.mxu0 0
      %626 = vmatpush.bf16.msra.mxu0 %v591
      %627 = vmatmul.bf16.gmra.mxu0 %v582
      %v628 = vpop.f32.mrf.mxu0
      %v629 = vadd.f32 %v570, %v628
      %v630 = vpop.f32.mrf.mxu0
      %631 = vdwg.mxu0
      %s632 = scalar_lea.vmem %s208, 12
      %v633 = vld [vmem:[%s632] sm:$0x3]
      %634 = vrot.lane.b32.xlu0 %v510, 109
      %v635 = vpop.permute.xlu0 %634
      %636 = vrot.lane.b32.xlu0 %v511, 109
      %v637 = vpop.permute.xlu0 %636
      %638 = vrot.lane.b32.xlu0 %v512, 109
      %v639 = vpop.permute.xlu0 %638
      %v640 = vsel %vm415, %v635, %v637
      %v641 = vsel %vm415, %v637, %v639
      %v643 = vsel %vm238, %v633, 0
      %v646 = vsel %vm242, %v640, 0
      %v649 = vsel %vm242, %v641, 0
      %v652 = vsel %vm242, %v639, 0
      %654 = vmatpush.bf16.msra.mxu0 0
      %655 = vmatpush.bf16.msra.mxu0 0
      %656 = vmatpush.bf16.msra.mxu0 0
      %657 = vmatpush.bf16.msra.mxu0 0
      %658 = vmatpush.bf16.msra.mxu0 0
      %659 = vmatpush.bf16.msra.mxu0 0
      %660 = vmatpush.bf16.msra.mxu0 0
      %661 = vmatpush.bf16.msra.mxu0 %v646
      %662 = vmatmul.bf16.gmra.mxu0 %v643
      %v663 = vpop.f32.mrf.mxu0
      %v664 = vadd.f32 0.0, %v663
      %v665 = vpop.f32.mrf.mxu0
      %666 = vdwg.mxu0
      %667 = vmatpush.bf16.msra.mxu0 0
      %668 = vmatpush.bf16.msra.mxu0 0
      %669 = vmatpush.bf16.msra.mxu0 0
      %670 = vmatpush.bf16.msra.mxu0 0
      %671 = vmatpush.bf16.msra.mxu0 0
      %672 = vmatpush.bf16.msra.mxu0 0
      %673 = vmatpush.bf16.msra.mxu0 0
      %674 = vmatpush.bf16.msra.mxu0 %v649
      %675 = vmatmul.bf16.gmra.mxu0 %v643
      %v676 = vpop.f32.mrf.mxu0
      %v677 = vadd.f32 0.0, %v676
      %v678 = vpop.f32.mrf.mxu0
      %679 = vdwg.mxu0
      %680 = vmatpush.bf16.msra.mxu0 0
      %681 = vmatpush.bf16.msra.mxu0 0
      %682 = vmatpush.bf16.msra.mxu0 0
      %683 = vmatpush.bf16.msra.mxu0 0
      %684 = vmatpush.bf16.msra.mxu0 0
      %685 = vmatpush.bf16.msra.mxu0 0
      %686 = vmatpush.bf16.msra.mxu0 0
      %687 = vmatpush.bf16.msra.mxu0 %v652
      %688 = vmatmul.bf16.gmra.mxu0 %v643
      %v689 = vpop.f32.mrf.mxu0
      %v690 = vadd.f32 0.0, %v689
      %v691 = vpop.f32.mrf.mxu0
      %692 = vdwg.mxu0
      %v693 = vadd.f32 %v603, %v664
      %v694 = vadd.f32 %v616, %v677
      %v695 = vadd.f32 %v629, %v690
      %s696 = scalar_lea.vmem %s208, 14
      %v697 = vld [vmem:[%s696] sm:$0x3]
      %698 = vrot.lane.b32.xlu0 %v510, 108
      %v699 = vpop.permute.xlu0 %698
      %700 = vrot.lane.b32.xlu0 %v511, 108
      %v701 = vpop.permute.xlu0 %700
      %702 = vrot.lane.b32.xlu0 %v512, 108
      %v703 = vpop.permute.xlu0 %702
      %vm704 = vcmask 883712
      %v705 = vsel %vm704, %v699, %v701
      %v706 = vsel %vm704, %v701, %v703
      %v708 = vsel %vm238, %v697, 0
      %v711 = vsel %vm242, %v705, 0
      %v714 = vsel %vm242, %v706, 0
      %v717 = vsel %vm242, %v703, 0
      %719 = vmatpush.bf16.msra.mxu0 0
      %720 = vmatpush.bf16.msra.mxu0 0
      %721 = vmatpush.bf16.msra.mxu0 0
      %722 = vmatpush.bf16.msra.mxu0 0
      %723 = vmatpush.bf16.msra.mxu0 0
      %724 = vmatpush.bf16.msra.mxu0 0
      %725 = vmatpush.bf16.msra.mxu0 0
      %726 = vmatpush.bf16.msra.mxu0 %v711
      %727 = vmatmul.bf16.gmra.mxu0 %v708
      %v728 = vpop.f32.mrf.mxu0
      %v729 = vadd.f32 0.0, %v728
      %v730 = vpop.f32.mrf.mxu0
      %731 = vdwg.mxu0
      %732 = vmatpush.bf16.msra.mxu0 0
      %733 = vmatpush.bf16.msra.mxu0 0
      %734 = vmatpush.bf16.msra.mxu0 0
      %735 = vmatpush.bf16.msra.mxu0 0
      %736 = vmatpush.bf16.msra.mxu0 0
      %737 = vmatpush.bf16.msra.mxu0 0
      %738 = vmatpush.bf16.msra.mxu0 0
      %739 = vmatpush.bf16.msra.mxu0 %v714
      %740 = vmatmul.bf16.gmra.mxu0 %v708
      %v741 = vpop.f32.mrf.mxu0
      %v742 = vadd.f32 0.0, %v741
      %v743 = vpop.f32.mrf.mxu0
      %744 = vdwg.mxu0
      %745 = vmatpush.bf16.msra.mxu0 0
      %746 = vmatpush.bf16.msra.mxu0 0
      %747 = vmatpush.bf16.msra.mxu0 0
      %748 = vmatpush.bf16.msra.mxu0 0
      %749 = vmatpush.bf16.msra.mxu0 0
      %750 = vmatpush.bf16.msra.mxu0 0
      %751 = vmatpush.bf16.msra.mxu0 0
      %752 = vmatpush.bf16.msra.mxu0 %v717
      %753 = vmatmul.bf16.gmra.mxu0 %v708
      %v754 = vpop.f32.mrf.mxu0
      %v755 = vadd.f32 0.0, %v754
      %v756 = vpop.f32.mrf.mxu0
      %757 = vdwg.mxu0
      %v758 = vadd.f32 %v693, %v729
      %v759 = vadd.f32 %v694, %v742
      %v760 = vadd.f32 %v695, %v755
      // Predicated region
      $region41: #{unet_up_forward.1} parent=31 // pred_check
        %p761 = pneg %p215
      $region42: #{unet_up_forward.1} parent=31 // pred_check_branch
        %763 = sbr.rel (%p761) target = $region44
      $region43: #{unet_up_forward.1} parent=31 // pred_region
        %v766 = vrot.slane %v759, 4
        %v767 = vsel %vm242, %v758, %v766
        %s769 = scalar_lea.vmem [#allocation2], 12
        %770 = vst [vmem:[%s769] sm:$0xff] %v767
        %vm771 = vcmask 257024
        %772 = vst.msk [vmem:[%s769 + $0x8] sm:$0xf] %vm771, %v760
      $region44: #{unet_up_forward.1} parent=31 // pred_fallthru
        _
      // Predicated region
      $region45: #{unet_up_forward.1} parent=31 // pred_check
        %p773 = pneg %p483
      $region46: #{unet_up_forward.1} parent=31 // pred_check_branch
        %775 = sbr.rel (%p773) target = $region48
      $region47: #{unet_up_forward.1} parent=31 // pred_region
        %s776 = scalar_lea.vmem [#allocation2], 12
        %v777 = vld [vmem:[%s776] sm:$0xff]
        %v778 = vld [vmem:[%s776 + $0x8] sm:$0xf]
        %v781 = vrot.slane %v759, 4
        %v782 = vsel %vm242, %v758, %v781
        %v784 = vadd.f32 %v777, %v782
        %v785 = vadd.f32 %v778, %v760
        %786 = vst [vmem:[%s776] sm:$0xff] %v784
        %vm787 = vcmask 257024
        %788 = vst.msk [vmem:[%s776 + $0x8] sm:$0xf] %vm787, %v785
      $region48: #{unet_up_forward.1} parent=31 // pred_fallthru
        _
      %v789 = vld [vmem:[%s204] sm:$0xff]
      %v790 = vld [vmem:[%s204 + $0x8] sm:$0xf]
      %s791 = scalar_lea.vmem %s208, 16
      %v792 = vld [vmem:[%s791] sm:$0x3]
      %s793 = scalar_lea.vmem %s208, 18
      %v794 = vld [vmem:[%s793] sm:$0x3]
      %v797 = vunpack.c.l.b16 %v789
      %v798 = vunpack.c.h.b16 %v789
      %v799 = vunpack.c.l.b16 %v790
      %v800 = vpack.c.b16 %v797, %v797
      %v801 = vpack.c.b16 %v798, %v798
      %v802 = vpack.c.b16 %v799, %v799
      %803 = vrot.lane.b32.xlu0 %v800, 109
      %v804 = vpop.permute.xlu0 %803
      %805 = vrot.lane.b32.xlu0 %v801, 109
      %v806 = vpop.permute.xlu0 %805
      %807 = vrot.lane.b32.xlu0 %v802, 109
      %v808 = vpop.permute.xlu0 %807
      %v809 = vsel %vm415, %v804, %v806
      %v810 = vsel %vm415, %v806, %v808
      %v812 = vsel %vm238, %v794, 0
      %v815 = vsel %vm242, %v809, 0
      %v818 = vsel %vm242, %v810, 0
      %v821 = vsel %vm242, %v808, 0
      %823 = vmatpush.bf16.msra.mxu0 0
      %824 = vmatpush.bf16.msra.mxu0 0
      %825 = vmatpush.bf16.msra.mxu0 0
      %826 = vmatpush.bf16.msra.mxu0 0
      %827 = vmatpush.bf16.msra.mxu0 0
      %828 = vmatpush.bf16.msra.mxu0 0
      %829 = vmatpush.bf16.msra.mxu0 0
      %830 = vmatpush.bf16.msra.mxu0 %v815
      %831 = vmatmul.bf16.gmra.mxu0 %v812
      %v832 = vpop.f32.mrf.mxu0
      %v833 = vadd.f32 0.0, %v832
      %v834 = vpop.f32.mrf.mxu0
      %835 = vdwg.mxu0
      %836 = vmatpush.bf16.msra.mxu0 0
      %837 = vmatpush.bf16.msra.mxu0 0
      %838 = vmatpush.bf16.msra.mxu0 0
      %839 = vmatpush.bf16.msra.mxu0 0
      %840 = vmatpush.bf16.msra.mxu0 0
      %841 = vmatpush.bf16.msra.mxu0 0
      %842 = vmatpush.bf16.msra.mxu0 0
      %843 = vmatpush.bf16.msra.mxu0 %v818
      %844 = vmatmul.bf16.gmra.mxu0 %v812
      %v845 = vpop.f32.mrf.mxu0
      %v846 = vadd.f32 0.0, %v845
      %v847 = vpop.f32.mrf.mxu0
      %848 = vdwg.mxu0
      %849 = vmatpush.bf16.msra.mxu0 0
      %850 = vmatpush.bf16.msra.mxu0 0
      %851 = vmatpush.bf16.msra.mxu0 0
      %852 = vmatpush.bf16.msra.mxu0 0
      %853 = vmatpush.bf16.msra.mxu0 0
      %854 = vmatpush.bf16.msra.mxu0 0
      %855 = vmatpush.bf16.msra.mxu0 0
      %856 = vmatpush.bf16.msra.mxu0 %v821
      %857 = vmatmul.bf16.gmra.mxu0 %v812
      %v858 = vpop.f32.mrf.mxu0
      %v859 = vadd.f32 0.0, %v858
      %v860 = vpop.f32.mrf.mxu0
      %861 = vdwg.mxu0
      %862 = vrot.lane.b32.xlu0 %v800, 110
      %v863 = vpop.permute.xlu0 %862
      %864 = vrot.lane.b32.xlu0 %v801, 110
      %v865 = vpop.permute.xlu0 %864
      %866 = vrot.lane.b32.xlu0 %v802, 110
      %v867 = vpop.permute.xlu0 %866
      %v868 = vsel %vm350, %v863, %v865
      %v869 = vsel %vm350, %v865, %v867
      %v871 = vsel %vm238, %v792, 0
      %v874 = vsel %vm242, %v868, 0
      %v877 = vsel %vm242, %v869, 0
      %v880 = vsel %vm242, %v867, 0
      %882 = vmatpush.bf16.msra.mxu0 0
      %883 = vmatpush.bf16.msra.mxu0 0
      %884 = vmatpush.bf16.msra.mxu0 0
      %885 = vmatpush.bf16.msra.mxu0 0
      %886 = vmatpush.bf16.msra.mxu0 0
      %887 = vmatpush.bf16.msra.mxu0 0
      %888 = vmatpush.bf16.msra.mxu0 0
      %889 = vmatpush.bf16.msra.mxu0 %v874
      %890 = vmatmul.bf16.gmra.mxu0 %v871
      %v891 = vpop.f32.mrf.mxu0
      %v892 = vadd.f32 %v833, %v891
      %v893 = vpop.f32.mrf.mxu0
      %894 = vdwg.mxu0
      %895 = vmatpush.bf16.msra.mxu0 0
      %896 = vmatpush.bf16.msra.mxu0 0
      %897 = vmatpush.bf16.msra.mxu0 0
      %898 = vmatpush.bf16.msra.mxu0 0
      %899 = vmatpush.bf16.msra.mxu0 0
      %900 = vmatpush.bf16.msra.mxu0 0
      %901 = vmatpush.bf16.msra.mxu0 0
      %902 = vmatpush.bf16.msra.mxu0 %v877
      %903 = vmatmul.bf16.gmra.mxu0 %v871
      %v904 = vpop.f32.mrf.mxu0
      %v905 = vadd.f32 %v846, %v904
      %v906 = vpop.f32.mrf.mxu0
      %907 = vdwg.mxu0
      %908 = vmatpush.bf16.msra.mxu0 0
      %909 = vmatpush.bf16.msra.mxu0 0
      %910 = vmatpush.bf16.msra.mxu0 0
      %911 = vmatpush.bf16.msra.mxu0 0
      %912 = vmatpush.bf16.msra.mxu0 0
      %913 = vmatpush.bf16.msra.mxu0 0
      %914 = vmatpush.bf16.msra.mxu0 0
      %915 = vmatpush.bf16.msra.mxu0 %v880
      %916 = vmatmul.bf16.gmra.mxu0 %v871
      %v917 = vpop.f32.mrf.mxu0
      %v918 = vadd.f32 %v859, %v917
      %v919 = vpop.f32.mrf.mxu0
      %920 = vdwg.mxu0
      %s921 = scalar_lea.vmem %s208, 20
      %v922 = vld [vmem:[%s921] sm:$0x3]
      %923 = vrot.lane.b32.xlu0 %v800, 92
      %v924 = vpop.permute.xlu0 %923
      %925 = vrot.lane.b32.xlu0 %v801, 92
      %v926 = vpop.permute.xlu0 %925
      %927 = vrot.lane.b32.xlu0 %v802, 92
      %v928 = vpop.permute.xlu0 %927
      %vm929 = vcmask 752640
      %v930 = vsel %vm929, %v924, %v926
      %v931 = vsel %vm929, %v926, %v928
      %v933 = vsel %vm238, %v922, 0
      %v936 = vsel %vm242, %v930, 0
      %v939 = vsel %vm242, %v931, 0
      %v942 = vsel %vm242, %v928, 0
      %944 = vmatpush.bf16.msra.mxu0 0
      %945 = vmatpush.bf16.msra.mxu0 0
      %946 = vmatpush.bf16.msra.mxu0 0
      %947 = vmatpush.bf16.msra.mxu0 0
      %948 = vmatpush.bf16.msra.mxu0 0
      %949 = vmatpush.bf16.msra.mxu0 0
      %950 = vmatpush.bf16.msra.mxu0 0
      %951 = vmatpush.bf16.msra.mxu0 %v936
      %952 = vmatmul.bf16.gmra.mxu0 %v933
      %v953 = vpop.f32.mrf.mxu0
      %v954 = vadd.f32 0.0, %v953
      %v955 = vpop.f32.mrf.mxu0
      %956 = vdwg.mxu0
      %957 = vmatpush.bf16.msra.mxu0 0
      %958 = vmatpush.bf16.msra.mxu0 0
      %959 = vmatpush.bf16.msra.mxu0 0
      %960 = vmatpush.bf16.msra.mxu0 0
      %961 = vmatpush.bf16.msra.mxu0 0
      %962 = vmatpush.bf16.msra.mxu0 0
      %963 = vmatpush.bf16.msra.mxu0 0
      %964 = vmatpush.bf16.msra.mxu0 %v939
      %965 = vmatmul.bf16.gmra.mxu0 %v933
      %v966 = vpop.f32.mrf.mxu0
      %v967 = vadd.f32 0.0, %v966
      %v968 = vpop.f32.mrf.mxu0
      %969 = vdwg.mxu0
      %970 = vmatpush.bf16.msra.mxu0 0
      %971 = vmatpush.bf16.msra.mxu0 0
      %972 = vmatpush.bf16.msra.mxu0 0
      %973 = vmatpush.bf16.msra.mxu0 0
      %974 = vmatpush.bf16.msra.mxu0 0
      %975 = vmatpush.bf16.msra.mxu0 0
      %976 = vmatpush.bf16.msra.mxu0 0
      %977 = vmatpush.bf16.msra.mxu0 %v942
      %978 = vmatmul.bf16.gmra.mxu0 %v933
      %v979 = vpop.f32.mrf.mxu0
      %v980 = vadd.f32 0.0, %v979
      %v981 = vpop.f32.mrf.mxu0
      %982 = vdwg.mxu0
      %v983 = vadd.f32 %v892, %v954
      %v984 = vadd.f32 %v905, %v967
      %v985 = vadd.f32 %v918, %v980
      %s986 = scalar_lea.vmem %s208, 22
      %v987 = vld [vmem:[%s986] sm:$0x3]
      %988 = vrot.lane.b32.xlu0 %v800, 91
      %v989 = vpop.permute.xlu0 %988
      %990 = vrot.lane.b32.xlu0 %v801, 91
      %v991 = vpop.permute.xlu0 %990
      %992 = vrot.lane.b32.xlu0 %v802, 91
      %v993 = vpop.permute.xlu0 %992
      %vm994 = vcmask 744448
      %v995 = vsel %vm994, %v989, %v991
      %v996 = vsel %vm994, %v991, %v993
      %v998 = vsel %vm238, %v987, 0
      %v1001 = vsel %vm242, %v995, 0
      %v1004 = vsel %vm242, %v996, 0
      %v1007 = vsel %vm242, %v993, 0
      %1009 = vmatpush.bf16.msra.mxu0 0
      %1010 = vmatpush.bf16.msra.mxu0 0
      %1011 = vmatpush.bf16.msra.mxu0 0
      %1012 = vmatpush.bf16.msra.mxu0 0
      %1013 = vmatpush.bf16.msra.mxu0 0
      %1014 = vmatpush.bf16.msra.mxu0 0
      %1015 = vmatpush.bf16.msra.mxu0 0
      %1016 = vmatpush.bf16.msra.mxu0 %v1001
      %1017 = vmatmul.bf16.gmra.mxu0 %v998
      %v1018 = vpop.f32.mrf.mxu0
      %v1019 = vadd.f32 0.0, %v1018
      %v1020 = vpop.f32.mrf.mxu0
      %1021 = vdwg.mxu0
      %1022 = vmatpush.bf16.msra.mxu0 0
      %1023 = vmatpush.bf16.msra.mxu0 0
      %1024 = vmatpush.bf16.msra.mxu0 0
      %1025 = vmatpush.bf16.msra.mxu0 0
      %1026 = vmatpush.bf16.msra.mxu0 0
      %1027 = vmatpush.bf16.msra.mxu0 0
      %1028 = vmatpush.bf16.msra.mxu0 0
      %1029 = vmatpush.bf16.msra.mxu0 %v1004
      %1030 = vmatmul.bf16.gmra.mxu0 %v998
      %v1031 = vpop.f32.mrf.mxu0
      %v1032 = vadd.f32 0.0, %v1031
      %v1033 = vpop.f32.mrf.mxu0
      %1034 = vdwg.mxu0
      %1035 = vmatpush.bf16.msra.mxu0 0
      %1036 = vmatpush.bf16.msra.mxu0 0
      %1037 = vmatpush.bf16.msra.mxu0 0
      %1038 = vmatpush.bf16.msra.mxu0 0
      %1039 = vmatpush.bf16.msra.mxu0 0
      %1040 = vmatpush.bf16.msra.mxu0 0
      %1041 = vmatpush.bf16.msra.mxu0 0
      %1042 = vmatpush.bf16.msra.mxu0 %v1007
      %1043 = vmatmul.bf16.gmra.mxu0 %v998
      %v1044 = vpop.f32.mrf.mxu0
      %v1045 = vadd.f32 0.0, %v1044
      %v1046 = vpop.f32.mrf.mxu0
      %1047 = vdwg.mxu0
      %v1048 = vadd.f32 %v983, %v1019
      %v1049 = vadd.f32 %v984, %v1032
      %v1050 = vadd.f32 %v985, %v1045
      // Predicated region
      $region49: #{unet_up_forward.1} parent=31 // pred_check
        %p1051 = pneg %p215
      $region50: #{unet_up_forward.1} parent=31 // pred_check_branch
        %1053 = sbr.rel (%p1051) target = $region52
      $region51: #{unet_up_forward.1} parent=31 // pred_region
        %v1056 = vrot.slane %v1049, 4
        %v1057 = vsel %vm242, %v1048, %v1056
        %s1059 = scalar_lea.vmem [#allocation2], 24
        %1060 = vst [vmem:[%s1059] sm:$0xff] %v1057
        %vm1061 = vcmask 257024
        %1062 = vst.msk [vmem:[%s1059 + $0x8] sm:$0xf] %vm1061, %v1050
      $region52: #{unet_up_forward.1} parent=31 // pred_fallthru
        _
      // Predicated region
      $region53: #{unet_up_forward.1} parent=31 // pred_check
        %p1063 = pneg %p483
      $region54: #{unet_up_forward.1} parent=31 // pred_check_branch
        %1065 = sbr.rel (%p1063) target = $region56
      $region55: #{unet_up_forward.1} parent=31 // pred_region
        %s1066 = scalar_lea.vmem [#allocation2], 24
        %v1067 = vld [vmem:[%s1066] sm:$0xff]
        %v1068 = vld [vmem:[%s1066 + $0x8] sm:$0xf]
        %v1071 = vrot.slane %v1049, 4
        %v1072 = vsel %vm242, %v1048, %v1071
        %v1074 = vadd.f32 %v1067, %v1072
        %v1075 = vadd.f32 %v1068, %v1050
        %1076 = vst [vmem:[%s1066] sm:$0xff] %v1074
        %vm1077 = vcmask 257024
        %1078 = vst.msk [vmem:[%s1066 + $0x8] sm:$0xf] %vm1077, %v1075
      $region56: #{unet_up_forward.1} parent=31 // pred_fallthru
        _
      %v1079 = vld [vmem:[%s204] sm:$0xff]
      %v1080 = vld [vmem:[%s204 + $0x8] sm:$0xf]
      %s1081 = scalar_lea.vmem %s208, 24
      %v1082 = vld [vmem:[%s1081] sm:$0x3]
      %s1083 = scalar_lea.vmem %s208, 26
      %v1084 = vld [vmem:[%s1083] sm:$0x3]
      %v1087 = vunpack.c.l.b16 %v1079
      %v1088 = vunpack.c.h.b16 %v1079
      %v1089 = vunpack.c.l.b16 %v1080
      %v1090 = vpack.c.b16 %v1087, %v1087
      %v1091 = vpack.c.b16 %v1088, %v1088
      %v1092 = vpack.c.b16 %v1089, %v1089
      %1093 = vrot.lane.b32.xlu0 %v1090, 108
      %v1094 = vpop.permute.xlu0 %1093
      %1095 = vrot.lane.b32.xlu0 %v1091, 108
      %v1096 = vpop.permute.xlu0 %1095
      %1097 = vrot.lane.b32.xlu0 %v1092, 108
      %v1098 = vpop.permute.xlu0 %1097
      %v1099 = vsel %vm704, %v1094, %v1096
      %v1100 = vsel %vm704, %v1096, %v1098
      %v1102 = vsel %vm238, %v1084, 0
      %v1105 = vsel %vm242, %v1099, 0
      %v1108 = vsel %vm242, %v1100, 0
      %v1111 = vsel %vm242, %v1098, 0
      %1113 = vmatpush.bf16.msra.mxu0 0
      %1114 = vmatpush.bf16.msra.mxu0 0
      %1115 = vmatpush.bf16.msra.mxu0 0
      %1116 = vmatpush.bf16.msra.mxu0 0
      %1117 = vmatpush.bf16.msra.mxu0 0
      %1118 = vmatpush.bf16.msra.mxu0 0
      %1119 = vmatpush.bf16.msra.mxu0 0
      %1120 = vmatpush.bf16.msra.mxu0 %v1105
      %1121 = vmatmul.bf16.gmra.mxu0 %v1102
      %v1122 = vpop.f32.mrf.mxu0
      %v1123 = vadd.f32 0.0, %v1122
      %v1124 = vpop.f32.mrf.mxu0
      %1125 = vdwg.mxu0
      %1126 = vmatpush.bf16.msra.mxu0 0
      %1127 = vmatpush.bf16.msra.mxu0 0
      %1128 = vmatpush.bf16.msra.mxu0 0
      %1129 = vmatpush.bf16.msra.mxu0 0
      %1130 = vmatpush.bf16.msra.mxu0 0
      %1131 = vmatpush.bf16.msra.mxu0 0
      %1132 = vmatpush.bf16.msra.mxu0 0
      %1133 = vmatpush.bf16.msra.mxu0 %v1108
      %1134 = vmatmul.bf16.gmra.mxu0 %v1102
      %v1135 = vpop.f32.mrf.mxu0
      %v1136 = vadd.f32 0.0, %v1135
      %v1137 = vpop.f32.mrf.mxu0
      %1138 = vdwg.mxu0
      %1139 = vmatpush.bf16.msra.mxu0 0
      %1140 = vmatpush.bf16.msra.mxu0 0
      %1141 = vmatpush.bf16.msra.mxu0 0
      %1142 = vmatpush.bf16.msra.mxu0 0
      %1143 = vmatpush.bf16.msra.mxu0 0
      %1144 = vmatpush.bf16.msra.mxu0 0
      %1145 = vmatpush.bf16.msra.mxu0 0
      %1146 = vmatpush.bf16.msra.mxu0 %v1111
      %1147 = vmatmul.bf16.gmra.mxu0 %v1102
      %v1148 = vpop.f32.mrf.mxu0
      %v1149 = vadd.f32 0.0, %v1148
      %v1150 = vpop.f32.mrf.mxu0
      %1151 = vdwg.mxu0
      %1152 = vrot.lane.b32.xlu0 %v1090, 109
      %v1153 = vpop.permute.xlu0 %1152
      %1154 = vrot.lane.b32.xlu0 %v1091, 109
      %v1155 = vpop.permute.xlu0 %1154
      %1156 = vrot.lane.b32.xlu0 %v1092, 109
      %v1157 = vpop.permute.xlu0 %1156
      %v1158 = vsel %vm415, %v1153, %v1155
      %v1159 = vsel %vm415, %v1155, %v1157
      %v1161 = vsel %vm238, %v1082, 0
      %v1164 = vsel %vm242, %v1158, 0
      %v1167 = vsel %vm242, %v1159, 0
      %v1170 = vsel %vm242, %v1157, 0
      %1172 = vmatpush.bf16.msra.mxu0 0
      %1173 = vmatpush.bf16.msra.mxu0 0
      %1174 = vmatpush.bf16.msra.mxu0 0
      %1175 = vmatpush.bf16.msra.mxu0 0
      %1176 = vmatpush.bf16.msra.mxu0 0
      %1177 = vmatpush.bf16.msra.mxu0 0
      %1178 = vmatpush.bf16.msra.mxu0 0
      %1179 = vmatpush.bf16.msra.mxu0 %v1164
      %1180 = vmatmul.bf16.gmra.mxu0 %v1161
      %v1181 = vpop.f32.mrf.mxu0
      %v1182 = vadd.f32 %v1123, %v1181
      %v1183 = vpop.f32.mrf.mxu0
      %1184 = vdwg.mxu0
      %1185 = vmatpush.bf16.msra.mxu0 0
      %1186 = vmatpush.bf16.msra.mxu0 0
      %1187 = vmatpush.bf16.msra.mxu0 0
      %1188 = vmatpush.bf16.msra.mxu0 0
      %1189 = vmatpush.bf16.msra.mxu0 0
      %1190 = vmatpush.bf16.msra.mxu0 0
      %1191 = vmatpush.bf16.msra.mxu0 0
      %1192 = vmatpush.bf16.msra.mxu0 %v1167
      %1193 = vmatmul.bf16.gmra.mxu0 %v1161
      %v1194 = vpop.f32.mrf.mxu0
      %v1195 = vadd.f32 %v1136, %v1194
      %v1196 = vpop.f32.mrf.mxu0
      %1197 = vdwg.mxu0
      %1198 = vmatpush.bf16.msra.mxu0 0
      %1199 = vmatpush.bf16.msra.mxu0 0
      %1200 = vmatpush.bf16.msra.mxu0 0
      %1201 = vmatpush.bf16.msra.mxu0 0
      %1202 = vmatpush.bf16.msra.mxu0 0
      %1203 = vmatpush.bf16.msra.mxu0 0
      %1204 = vmatpush.bf16.msra.mxu0 0
      %1205 = vmatpush.bf16.msra.mxu0 %v1170
      %1206 = vmatmul.bf16.gmra.mxu0 %v1161
      %v1207 = vpop.f32.mrf.mxu0
      %v1208 = vadd.f32 %v1149, %v1207
      %v1209 = vpop.f32.mrf.mxu0
      %1210 = vdwg.mxu0
      %s1211 = scalar_lea.vmem %s208, 28
      %v1212 = vld [vmem:[%s1211] sm:$0x3]
      %1213 = vrot.lane.b32.xlu0 %v1090, 91
      %v1214 = vpop.permute.xlu0 %1213
      %1215 = vrot.lane.b32.xlu0 %v1091, 91
      %v1216 = vpop.permute.xlu0 %1215
      %1217 = vrot.lane.b32.xlu0 %v1092, 91
      %v1218 = vpop.permute.xlu0 %1217
      %v1219 = vsel %vm994, %v1214, %v1216
      %v1220 = vsel %vm994, %v1216, %v1218
      %v1222 = vsel %vm238, %v1212, 0
      %v1225 = vsel %vm242, %v1219, 0
      %v1228 = vsel %vm242, %v1220, 0
      %v1231 = vsel %vm242, %v1218, 0
      %1233 = vmatpush.bf16.msra.mxu0 0
      %1234 = vmatpush.bf16.msra.mxu0 0
      %1235 = vmatpush.bf16.msra.mxu0 0
      %1236 = vmatpush.bf16.msra.mxu0 0
      %1237 = vmatpush.bf16.msra.mxu0 0
      %1238 = vmatpush.bf16.msra.mxu0 0
      %1239 = vmatpush.bf16.msra.mxu0 0
      %1240 = vmatpush.bf16.msra.mxu0 %v1225
      %1241 = vmatmul.bf16.gmra.mxu0 %v1222
      %v1242 = vpop.f32.mrf.mxu0
      %v1243 = vadd.f32 0.0, %v1242
      %v1244 = vpop.f32.mrf.mxu0
      %1245 = vdwg.mxu0
      %1246 = vmatpush.bf16.msra.mxu0 0
      %1247 = vmatpush.bf16.msra.mxu0 0
      %1248 = vmatpush.bf16.msra.mxu0 0
      %1249 = vmatpush.bf16.msra.mxu0 0
      %1250 = vmatpush.bf16.msra.mxu0 0
      %1251 = vmatpush.bf16.msra.mxu0 0
      %1252 = vmatpush.bf16.msra.mxu0 0
      %1253 = vmatpush.bf16.msra.mxu0 %v1228
      %1254 = vmatmul.bf16.gmra.mxu0 %v1222
      %v1255 = vpop.f32.mrf.mxu0
      %v1256 = vadd.f32 0.0, %v1255
      %v1257 = vpop.f32.mrf.mxu0
      %1258 = vdwg.mxu0
      %1259 = vmatpush.bf16.msra.mxu0 0
      %1260 = vmatpush.bf16.msra.mxu0 0
      %1261 = vmatpush.bf16.msra.mxu0 0
      %1262 = vmatpush.bf16.msra.mxu0 0
      %1263 = vmatpush.bf16.msra.mxu0 0
      %1264 = vmatpush.bf16.msra.mxu0 0
      %1265 = vmatpush.bf16.msra.mxu0 0
      %1266 = vmatpush.bf16.msra.mxu0 %v1231
      %1267 = vmatmul.bf16.gmra.mxu0 %v1222
      %v1268 = vpop.f32.mrf.mxu0
      %v1269 = vadd.f32 0.0, %v1268
      %v1270 = vpop.f32.mrf.mxu0
      %1271 = vdwg.mxu0
      %v1272 = vadd.f32 %v1182, %v1243
      %v1273 = vadd.f32 %v1195, %v1256
      %v1274 = vadd.f32 %v1208, %v1269
      %s1275 = scalar_lea.vmem %s208, 30
      %v1276 = vld [vmem:[%s1275] sm:$0x3]
      %1277 = vrot.lane.b32.xlu0 %v1090, 90
      %v1278 = vpop.permute.xlu0 %1277
      %1279 = vrot.lane.b32.xlu0 %v1091, 90
      %v1280 = vpop.permute.xlu0 %1279
      %1281 = vrot.lane.b32.xlu0 %v1092, 90
      %v1282 = vpop.permute.xlu0 %1281
      %vm1283 = vcmask 736256
      %v1284 = vsel %vm1283, %v1278, %v1280
      %v1285 = vsel %vm1283, %v1280, %v1282
      %v1287 = vsel %vm238, %v1276, 0
      %v1290 = vsel %vm242, %v1284, 0
      %v1293 = vsel %vm242, %v1285, 0
      %v1296 = vsel %vm242, %v1282, 0
      %1298 = vmatpush.bf16.msra.mxu0 0
      %1299 = vmatpush.bf16.msra.mxu0 0
      %1300 = vmatpush.bf16.msra.mxu0 0
      %1301 = vmatpush.bf16.msra.mxu0 0
      %1302 = vmatpush.bf16.msra.mxu0 0
      %1303 = vmatpush.bf16.msra.mxu0 0
      %1304 = vmatpush.bf16.msra.mxu0 0
      %1305 = vmatpush.bf16.msra.mxu0 %v1290
      %1306 = vmatmul.bf16.gmra.mxu0 %v1287
      %v1307 = vpop.f32.mrf.mxu0
      %v1308 = vadd.f32 0.0, %v1307
      %v1309 = vpop.f32.mrf.mxu0
      %1310 = vdwg.mxu0
      %1311 = vmatpush.bf16.msra.mxu0 0
      %1312 = vmatpush.bf16.msra.mxu0 0
      %1313 = vmatpush.bf16.msra.mxu0 0
      %1314 = vmatpush.bf16.msra.mxu0 0
      %1315 = vmatpush.bf16.msra.mxu0 0
      %1316 = vmatpush.bf16.msra.mxu0 0
      %1317 = vmatpush.bf16.msra.mxu0 0
      %1318 = vmatpush.bf16.msra.mxu0 %v1293
      %1319 = vmatmul.bf16.gmra.mxu0 %v1287
      %v1320 = vpop.f32.mrf.mxu0
      %v1321 = vadd.f32 0.0, %v1320
      %v1322 = vpop.f32.mrf.mxu0
      %1323 = vdwg.mxu0
      %1324 = vmatpush.bf16.msra.mxu0 0
      %1325 = vmatpush.bf16.msra.mxu0 0
      %1326 = vmatpush.bf16.msra.mxu0 0
      %1327 = vmatpush.bf16.msra.mxu0 0
      %1328 = vmatpush.bf16.msra.mxu0 0
      %1329 = vmatpush.bf16.msra.mxu0 0
      %1330 = vmatpush.bf16.msra.mxu0 0
      %1331 = vmatpush.bf16.msra.mxu0 %v1296
      %1332 = vmatmul.bf16.gmra.mxu0 %v1287
      %v1333 = vpop.f32.mrf.mxu0
      %v1334 = vadd.f32 0.0, %v1333
      %v1335 = vpop.f32.mrf.mxu0
      %1336 = vdwg.mxu0
      %v1337 = vadd.f32 %v1272, %v1308
      %v1338 = vadd.f32 %v1273, %v1321
      %v1339 = vadd.f32 %v1274, %v1334
      // Predicated region
      $region57: #{unet_up_forward.1} parent=31 // pred_check
        %p1340 = pneg %p215
      $region58: #{unet_up_forward.1} parent=31 // pred_check_branch
        %1342 = sbr.rel (%p1340) target = $region60
      $region59: #{unet_up_forward.1} parent=31 // pred_region
        %v1345 = vrot.slane %v1338, 4
        %v1346 = vsel %vm242, %v1337, %v1345
        %s1348 = scalar_lea.vmem [#allocation2], 36
        %1349 = vst [vmem:[%s1348] sm:$0xff] %v1346
        %vm1350 = vcmask 257024
        %1351 = vst.msk [vmem:[%s1348 + $0x8] sm:$0xf] %vm1350, %v1339
      $region60: #{unet_up_forward.1} parent=31 // pred_fallthru
        _
      // Predicated region
      $region61: #{unet_up_forward.1} parent=31 // pred_check
        %p1352 = pneg %p483
      $region62: #{unet_up_forward.1} parent=31 // pred_check_branch
        %1354 = sbr.rel (%p1352) target = $region64
      $region63: #{unet_up_forward.1} parent=31 // pred_region
        %s1355 = scalar_lea.vmem [#allocation2], 36
        %v1356 = vld [vmem:[%s1355] sm:$0xff]
        %v1357 = vld [vmem:[%s1355 + $0x8] sm:$0xf]
        %v1360 = vrot.slane %v1338, 4
        %v1361 = vsel %vm242, %v1337, %v1360
        %v1363 = vadd.f32 %v1356, %v1361
        %v1364 = vadd.f32 %v1357, %v1339
        %1365 = vst [vmem:[%s1355] sm:$0xff] %v1363
        %vm1366 = vcmask 257024
        %1367 = vst.msk [vmem:[%s1355 + $0x8] sm:$0xf] %vm1366, %v1364
      $region64: #{unet_up_forward.1} parent=31 // pred_fallthru
        _
      // Predicated region
      $region65: #{unet_up_forward.1} parent=31 // pred_check
        %p1368 = pneg %p215
      $region66: #{unet_up_forward.1} parent=31 // pred_check_branch
        %1370 = sbr.rel (%p1368) target = $region68
      $region67: #{unet_up_forward.1} parent=31 // pred_region
        %v1371 = vld [vmem:[%s0] sm:$0x7]
        %v1372 = vld [vmem:[#allocation2] sm:$0xff]
        %v1373 = vld [vmem:[#allocation2 + $0x8] sm:$0xf]
        %v1375 = vperm.slane %v1371, 0
        %v1376 = vperm.slane %v1371, 1
        %v1377 = vperm.slane %v1371, 2
        %v1379 = vrot.slane %v1376, 4
        %v1380 = vsel %vm242, %v1375, %v1379
        %v1382 = vmul.f32 %v1372, %v1380
        %v1383 = vmul.f32 %v1373, %v1377
        %1386 = vst [vmem:[#allocation1] ss:$2 sm:$0xff] %v1382
        %s1387 = scalar_lea.vmem [#allocation1], 16
        %1388 = vst [vmem:[%s1387] ss:$2 sm:$0xff] %v1383
        %v1389 = vld.sshfl [vmem:[#allocation1] sm:$0xff pattern:$0x75316420]
        %v1390 = vld.sshfl [vmem:[#allocation1 + $0x8] sm:$0xff pattern:$0x75316420]
        %v1391 = vld.sshfl [vmem:[#allocation1 + $0x10] sm:$0xff pattern:$0x75316420]
        %v1395 = vsel %vm242, %v1389, 0.0
        %v1396 = vsel %vm242, %v1390, 0.0
        %v1397 = vadd.f32 %v1395, %v1396
        %vm1398 = vcmask 257024
        %v1399 = vsel %vm1398, %v1391, 0.0
        %v1400 = vadd.f32 %v1397, %v1399
        %1401 = vadd.xlane.f32.xlu0 %v1400
        %v1402 = vpop.xlane.xlu0 %1401
        %s1403 = scalar_lea.vmem [#allocation2], 12
        %v1404 = vld [vmem:[%s1403] sm:$0xff]
        %v1405 = vld [vmem:[%s1403 + $0x8] sm:$0xf]
        %v1406 = vmul.f32 %v1404, %v1380
        %v1407 = vmul.f32 %v1405, %v1377
        %1410 = vst [vmem:[#allocation1] ss:$2 sm:$0xff] %v1406
        %s1411 = scalar_lea.vmem [#allocation1], 16
        %1412 = vst [vmem:[%s1411] ss:$2 sm:$0xff] %v1407
        %v1413 = vld.sshfl [vmem:[#allocation1] sm:$0xff pattern:$0x75316420]
        %v1414 = vld.sshfl [vmem:[#allocation1 + $0x8] sm:$0xff pattern:$0x75316420]
        %v1415 = vld.sshfl [vmem:[#allocation1 + $0x10] sm:$0xff pattern:$0x75316420]
        %v1419 = vsel %vm242, %v1413, 0.0
        %v1420 = vsel %vm242, %v1414, 0.0
        %v1421 = vadd.f32 %v1419, %v1420
        %v1422 = vsel %vm1398, %v1415, 0.0
        %v1423 = vadd.f32 %v1421, %v1422
        %1424 = vadd.xlane.f32.xlu0 %v1423
        %v1425 = vpop.xlane.xlu0 %1424
        %v1426 = vadd.f32 %v1402, %v1425
        %s1427 = scalar_lea.vmem [#allocation2], 24
        %v1428 = vld [vmem:[%s1427] sm:$0xff]
        %v1429 = vld [vmem:[%s1427 + $0x8] sm:$0xf]
        %v1430 = vmul.f32 %v1428, %v1380
        %v1431 = vmul.f32 %v1429, %v1377
        %1434 = vst [vmem:[#allocation1] ss:$2 sm:$0xff] %v1430
        %s1435 = scalar_lea.vmem [#allocation1], 16
        %1436 = vst [vmem:[%s1435] ss:$2 sm:$0xff] %v1431
        %v1437 = vld.sshfl [vmem:[#allocation1] sm:$0xff pattern:$0x75316420]
        %v1438 = vld.sshfl [vmem:[#allocation1 + $0x8] sm:$0xff pattern:$0x75316420]
        %v1439 = vld.sshfl [vmem:[#allocation1 + $0x10] sm:$0xff pattern:$0x75316420]
        %v1443 = vsel %vm242, %v1437, 0.0
        %v1444 = vsel %vm242, %v1438, 0.0
        %v1445 = vadd.f32 %v1443, %v1444
        %v1446 = vsel %vm1398, %v1439, 0.0
        %v1447 = vadd.f32 %v1445, %v1446
        %1448 = vadd.xlane.f32.xlu0 %v1447
        %v1449 = vpop.xlane.xlu0 %1448
        %v1450 = vadd.f32 %v1426, %v1449
        %s1451 = scalar_lea.vmem [#allocation2], 36
        %v1452 = vld [vmem:[%s1451] sm:$0xff]
        %v1453 = vld [vmem:[%s1451 + $0x8] sm:$0xf]
        %v1454 = vmul.f32 %v1452, %v1380
        %v1455 = vmul.f32 %v1453, %v1377
        %1458 = vst [vmem:[#allocation1] ss:$2 sm:$0xff] %v1454
        %s1459 = scalar_lea.vmem [#allocation1], 16
        %1460 = vst [vmem:[%s1459] ss:$2 sm:$0xff] %v1455
        %v1461 = vld.sshfl [vmem:[#allocation1] sm:$0xff pattern:$0x75316420]
        %v1462 = vld.sshfl [vmem:[#allocation1 + $0x8] sm:$0xff pattern:$0x75316420]
        %v1463 = vld.sshfl [vmem:[#allocation1 + $0x10] sm:$0xff pattern:$0x75316420]
        %v1467 = vsel %vm242, %v1461, 0.0
        %v1468 = vsel %vm242, %v1462, 0.0
        %v1469 = vadd.f32 %v1467, %v1468
        %v1470 = vsel %vm1398, %v1463, 0.0
        %v1471 = vadd.f32 %v1469, %v1470
        %1472 = vadd.xlane.f32.xlu0 %v1471
        %v1473 = vpop.xlane.xlu0 %1472
        %v1474 = vadd.f32 %v1450, %v1473
        %v1475 = vmul.f32 %v1474, 0.0009765625
        %v1478 = vunpack.c.l.s4 839922192
        %v1479 = vunpack.c.0.s8 %v1478
        %v1480 = vperm.slane %v1475, %v1479
        %v1482 = vsub.f32 %v1372, %v1480
        %v1483 = vsub.f32 %v1373, %v1480
        %v1484 = vmul.f32 %v1482, %v1380
        %v1485 = vmul.f32 %v1483, %v1377
        %v1486 = vmul.f32 %v1484, %v1484
        %v1487 = vmul.f32 %v1485, %v1485
        %1490 = vst [vmem:[#allocation1] ss:$2 sm:$0xff] %v1486
        %s1491 = scalar_lea.vmem [#allocation1], 16
        %1492 = vst [vmem:[%s1491] ss:$2 sm:$0xff] %v1487
        %v1493 = vld.sshfl [vmem:[#allocation1] sm:$0xff pattern:$0x75316420]
        %v1494 = vld.sshfl [vmem:[#allocation1 + $0x8] sm:$0xff pattern:$0x75316420]
        %v1495 = vld.sshfl [vmem:[#allocation1 + $0x10] sm:$0xff pattern:$0x75316420]
        %v1499 = vsel %vm242, %v1493, 0.0
        %v1500 = vsel %vm242, %v1494, 0.0
        %v1501 = vadd.f32 %v1499, %v1500
        %v1502 = vsel %vm1398, %v1495, 0.0
        %v1503 = vadd.f32 %v1501, %v1502
        %1504 = vadd.xlane.f32.xlu0 %v1503
        %v1505 = vpop.xlane.xlu0 %1504
        %v1506 = vsub.f32 %v1404, %v1480
        %v1507 = vsub.f32 %v1405, %v1480
        %v1508 = vmul.f32 %v1506, %v1380
        %v1509 = vmul.f32 %v1507, %v1377
        %v1510 = vmul.f32 %v1508, %v1508
        %v1511 = vmul.f32 %v1509, %v1509
        %1514 = vst [vmem:[#allocation1] ss:$2 sm:$0xff] %v1510
        %s1515 = scalar_lea.vmem [#allocation1], 16
        %1516 = vst [vmem:[%s1515] ss:$2 sm:$0xff] %v1511
        %v1517 = vld.sshfl [vmem:[#allocation1] sm:$0xff pattern:$0x75316420]
        %v1518 = vld.sshfl [vmem:[#allocation1 + $0x8] sm:$0xff pattern:$0x75316420]
        %v1519 = vld.sshfl [vmem:[#allocation1 + $0x10] sm:$0xff pattern:$0x75316420]
        %v1523 = vsel %vm242, %v1517, 0.0
        %v1524 = vsel %vm242, %v1518, 0.0
        %v1525 = vadd.f32 %v1523, %v1524
        %v1526 = vsel %vm1398, %v1519, 0.0
        %v1527 = vadd.f32 %v1525, %v1526
        %1528 = vadd.xlane.f32.xlu0 %v1527
        %v1529 = vpop.xlane.xlu0 %1528
        %v1530 = vadd.f32 %v1505, %v1529
        %v1531 = vsub.f32 %v1428, %v1480
        %v1532 = vsub.f32 %v1429, %v1480
        %v1533 = vmul.f32 %v1531, %v1380
        %v1534 = vmul.f32 %v1532, %v1377
        %v1535 = vmul.f32 %v1533, %v1533
        %v1536 = vmul.f32 %v1534, %v1534
        %1539 = vst [vmem:[#allocation1] ss:$2 sm:$0xff] %v1535
        %s1540 = scalar_lea.vmem [#allocation1], 16
        %1541 = vst [vmem:[%s1540] ss:$2 sm:$0xff] %v1536
        %v1542 = vld.sshfl [vmem:[#allocation1] sm:$0xff pattern:$0x75316420]
        %v1543 = vld.sshfl [vmem:[#allocation1 + $0x8] sm:$0xff pattern:$0x75316420]
        %v1544 = vld.sshfl [vmem:[#allocation1 + $0x10] sm:$0xff pattern:$0x75316420]
        %v1548 = vsel %vm242, %v1542, 0.0
        %v1549 = vsel %vm242, %v1543, 0.0
        %v1550 = vadd.f32 %v1548, %v1549
        %v1551 = vsel %vm1398, %v1544, 0.0
        %v1552 = vadd.f32 %v1550, %v1551
        %1553 = vadd.xlane.f32.xlu0 %v1552
        %v1554 = vpop.xlane.xlu0 %1553
        %v1555 = vadd.f32 %v1530, %v1554
        %v1556 = vsub.f32 %v1452, %v1480
        %v1557 = vsub.f32 %v1453, %v1480
        %v1558 = vmul.f32 %v1556, %v1380
        %v1559 = vmul.f32 %v1557, %v1377
        %v1560 = vmul.f32 %v1558, %v1558
        %v1561 = vmul.f32 %v1559, %v1559
        %1564 = vst [vmem:[#allocation1] ss:$2 sm:$0xff] %v1560
        %s1565 = scalar_lea.vmem [#allocation1], 16
        %1566 = vst [vmem:[%s1565] ss:$2 sm:$0xff] %v1561
        %v1567 = vld.sshfl [vmem:[#allocation1] sm:$0xff pattern:$0x75316420]
        %v1568 = vld.sshfl [vmem:[#allocation1 + $0x8] sm:$0xff pattern:$0x75316420]
        %v1569 = vld.sshfl [vmem:[#allocation1 + $0x10] sm:$0xff pattern:$0x75316420]
        %v1573 = vsel %vm242, %v1567, 0.0
        %v1574 = vsel %vm242, %v1568, 0.0
        %v1575 = vadd.f32 %v1573, %v1574
        %v1576 = vsel %vm1398, %v1569, 0.0
        %v1577 = vadd.f32 %v1575, %v1576
        %1578 = vadd.xlane.f32.xlu0 %v1577
        %v1579 = vpop.xlane.xlu0 %1578
        %v1580 = vadd.f32 %v1555, %v1579
        %v1581 = vmul.f32 %v1580, 0.0009765625
        %v1582 = vadd.f32 %v1581, 1e-05
        %v1583 = vrsqrt.pop %v1582
        %v1584 = vmul.f32 %v1583, %v1582
        %v1585 = vmul.f32 %v1584, %v1583
        %v1586 = vmul.f32 0.5, %v1585
        %v1587 = vsub.f32 1.5, %v1586
        %v1588 = vmul.f32 %v1583, %v1587
        %vm1589 = vweird.f32 %v1582
        %vm1590 = vweird.f32 %v1583
        %vm1591 = vmor %vm1589, %vm1590
        %v1592 = vsel %vm1591, %v1583, %v1588
        %v1595 = vunpack.c.l.s4 839922192
        %v1596 = vunpack.c.0.s8 %v1595
        %v1597 = vperm.slane %v1592, %v1596
        %v1599 = vmul.f32 %v1482, %v1597
        %v1600 = vmul.f32 %v1483, %v1597
        %vm1601 = vcmp.gt.f32.partialorder %v1599, 0.0
        %vm1602 = vcmp.gt.f32.partialorder %v1600, 0.0
        %v1603 = vmul.f32 %v1599, 0.2
        %v1604 = vmul.f32 %v1600, 0.2
        %v1605 = vsel %vm1601, %v1599, %v1603
        %v1606 = vsel %vm1602, %v1600, %v1604
        %1609 = vst [vmem:[#allocation1] ss:$2 sm:$0xff] %v1605
        %s1610 = scalar_lea.vmem [#allocation1], 16
        %1611 = vst [vmem:[%s1610] ss:$2 sm:$0xff] %v1606
        %v1612 = vld.sshfl [vmem:[#allocation1] sm:$0xff pattern:$0x75316420]
        %v1613 = vld.sshfl [vmem:[#allocation1 + $0x8] sm:$0xff pattern:$0x75316420]
        %v1614 = vld.sshfl [vmem:[#allocation1 + $0x10] sm:$0xff pattern:$0x75316420]
        %v1618 = vpack.c.bf16 %v1613, %v1612
        %v1619 = vpack.c.bf16 %v1614, %v1614
        %v1622 = vrot.slane %v1618, 2
        %v1623 = vrot.slane %v1619, 4
        %v1624 = vrot.slane %v1619, 6
        %vm1625 = vcmask 1041408
        %v1628 = vsel %vm1625, %v1618, %v1622
        %vm1629 = vcmask 1045508
        %v1632 = vsel %vm1629, %v1623, %v1624
        %v1633 = vsel %vm242, %v1628, %v1632
        %vm1635 = vcmask 1043458
        %vm1636 = vmor %vm1635, %vm1625
        %vm1637 = vcmask 259076
        %vm1638 = vmor %vm1637, %vm1636
        %1639 = vst.msk [vmem:[%s213] sm:$0x3f] %vm1638, %v1633
        %v1640 = vld [vmem:[%s1403] sm:$0xff]
        %v1641 = vld [vmem:[%s1403 + $0x8] sm:$0xf]
        %v1642 = vsub.f32 %v1640, %v1480
        %v1643 = vsub.f32 %v1641, %v1480
        %v1644 = vmul.f32 %v1642, %v1597
        %v1645 = vmul.f32 %v1643, %v1597
        %vm1646 = vcmp.gt.f32.partialorder %v1644, 0.0
        %vm1647 = vcmp.gt.f32.partialorder %v1645, 0.0
        %v1648 = vmul.f32 %v1644, 0.2
        %v1649 = vmul.f32 %v1645, 0.2
        %v1650 = vsel %vm1646, %v1644, %v1648
        %v1651 = vsel %vm1647, %v1645, %v1649
        %1654 = vst [vmem:[#allocation1] ss:$2 sm:$0xff] %v1650
        %s1655 = scalar_lea.vmem [#allocation1], 16
        %1656 = vst [vmem:[%s1655] ss:$2 sm:$0xff] %v1651
        %v1657 = vld.sshfl [vmem:[#allocation1] sm:$0xff pattern:$0x75316420]
        %v1658 = vld.sshfl [vmem:[#allocation1 + $0x8] sm:$0xff pattern:$0x75316420]
        %v1659 = vld.sshfl [vmem:[#allocation1 + $0x10] sm:$0xff pattern:$0x75316420]
        %v1663 = vpack.c.bf16 %v1658, %v1657
        %v1664 = vpack.c.bf16 %v1659, %v1659
        %v1667 = vrot.slane %v1663, 2
        %v1668 = vrot.slane %v1664, 4
        %v1669 = vrot.slane %v1664, 6
        %v1672 = vsel %vm1625, %v1663, %v1667
        %v1675 = vsel %vm1629, %v1668, %v1669
        %v1676 = vsel %vm242, %v1672, %v1675
        %s1678 = scalar_lea.vmem %s213, 6
        %1679 = vst.msk [vmem:[%s1678] sm:$0x3f] %vm1638, %v1676
        %v1680 = vld [vmem:[%s1427] sm:$0xff]
        %v1681 = vld [vmem:[%s1427 + $0x8] sm:$0xf]
        %v1682 = vsub.f32 %v1680, %v1480
        %v1683 = vsub.f32 %v1681, %v1480
        %v1684 = vmul.f32 %v1682, %v1597
        %v1685 = vmul.f32 %v1683, %v1597
        %vm1686 = vcmp.gt.f32.partialorder %v1684, 0.0
        %vm1687 = vcmp.gt.f32.partialorder %v1685, 0.0
        %v1688 = vmul.f32 %v1684, 0.2
        %v1689 = vmul.f32 %v1685, 0.2
        %v1690 = vsel %vm1686, %v1684, %v1688
        %v1691 = vsel %vm1687, %v1685, %v1689
        %1694 = vst [vmem:[#allocation1] ss:$2 sm:$0xff] %v1690
        %s1695 = scalar_lea.vmem [#allocation1], 16
        %1696 = vst [vmem:[%s1695] ss:$2 sm:$0xff] %v1691
        %v1697 = vld.sshfl [vmem:[#allocation1] sm:$0xff pattern:$0x75316420]
        %v1698 = vld.sshfl [vmem:[#allocation1 + $0x8] sm:$0xff pattern:$0x75316420]
        %v1699 = vld.sshfl [vmem:[#allocation1 + $0x10] sm:$0xff pattern:$0x75316420]
        %v1703 = vpack.c.bf16 %v1698, %v1697
        %v1704 = vpack.c.bf16 %v1699, %v1699
        %v1707 = vrot.slane %v1703, 2
        %v1708 = vrot.slane %v1704, 4
        %v1709 = vrot.slane %v1704, 6
        %v1712 = vsel %vm1625, %v1703, %v1707
        %v1715 = vsel %vm1629, %v1708, %v1709
        %v1716 = vsel %vm242, %v1712, %v1715
        %s1718 = scalar_lea.vmem %s213, 12
        %1719 = vst.msk [vmem:[%s1718] sm:$0x3f] %vm1638, %v1716
        %v1720 = vld [vmem:[%s1451] sm:$0xff]
        %v1721 = vld [vmem:[%s1451 + $0x8] sm:$0xf]
        %v1722 = vsub.f32 %v1720, %v1480
        %v1723 = vsub.f32 %v1721, %v1480
        %v1724 = vmul.f32 %v1722, %v1597
        %v1725 = vmul.f32 %v1723, %v1597
        %vm1726 = vcmp.gt.f32.partialorder %v1724, 0.0
        %vm1727 = vcmp.gt.f32.partialorder %v1725, 0.0
        %v1728 = vmul.f32 %v1724, 0.2
        %v1729 = vmul.f32 %v1725, 0.2
        %v1730 = vsel %vm1726, %v1724, %v1728
        %v1731 = vsel %vm1727, %v1725, %v1729
        %1734 = vst [vmem:[#allocation1] ss:$2 sm:$0xff] %v1730
        %s1735 = scalar_lea.vmem [#allocation1], 16
        %1736 = vst [vmem:[%s1735] ss:$2 sm:$0xff] %v1731
        %v1737 = vld.sshfl [vmem:[#allocation1] sm:$0xff pattern:$0x75316420]
        %v1738 = vld.sshfl [vmem:[#allocation1 + $0x8] sm:$0xff pattern:$0x75316420]
        %v1739 = vld.sshfl [vmem:[#allocation1 + $0x10] sm:$0xff pattern:$0x75316420]
        %v1743 = vpack.c.bf16 %v1738, %v1737
        %v1744 = vpack.c.bf16 %v1739, %v1739
        %v1747 = vrot.slane %v1743, 2
        %v1748 = vrot.slane %v1744, 4
        %v1749 = vrot.slane %v1744, 6
        %v1752 = vsel %vm1625, %v1743, %v1747
        %v1755 = vsel %vm1629, %v1748, %v1749
        %v1756 = vsel %vm242, %v1752, %v1755
        %s1758 = scalar_lea.vmem %s213, 18
        %1759 = vst.msk [vmem:[%s1758] sm:$0x3f] %vm1638, %v1756
      $region68: #{unet_up_forward.1} parent=31 // pred_fallthru
        _
      %p1760 = scmp.lt.s32.totalorder %s18, 1
      %s1761 = scalar_select %p1760, %s18, 1
      %s1762 = smul.addr %s1761, 12
      %s1763 = smul.addr %s1762, 2
      %s1764 = scalar_lea.vmem %s3, %s1763
      // Predicated region
      $region69: #{unet_up_forward.1} parent=31 // pred_check
        %p1765 = pneg %p119
      $region70: #{unet_up_forward.1} parent=31 // pred_check_branch
        %1767 = sbr.rel (%p1765) target = $region72
      $region71: #{unet_up_forward.1} parent=31 // pred_region
        _
      $region72: #{unet_up_forward.1} parent=31 // pred_fallthru
        _
    $region32: #{unet_up_forward.1} parent=5 // pred_fallthru
      _
    %p1768 = scmp.le.s32.totalorder 2, %s9
    // Predicated region
    $region73: #{unet_up_forward.1} parent=5 // pred_check
      %p1769 = pneg %p1768
    $region74: #{unet_up_forward.1} parent=5 // pred_check_branch
      %1771 = sbr.rel (%p1769) target = $region76
    $region75: #{unet_up_forward.1} parent=5 // pred_region
      %s1772 = ssub.s32 %s9, 2
      // Predicated region
      $region77: #{unet_up_forward.1} parent=75 // pred_check
        %p1773 = pneg %p125
      $region78: #{unet_up_forward.1} parent=75 // pred_check_branch
        %1775 = sbr.rel (%p1773) target = $region80
      $region79: #{unet_up_forward.1} parent=75 // pred_region
        %p1776 = scmp.lt.s32.totalorder %s20, 1
        %s1777 = scalar_select %p1776, %s20, 1
        %s1778 = smul.addr %s1777, 12
        %s1779 = smul.addr %s1778, 2
        %s1780 = scalar_lea.vmem %s3, %s1779
      $region80: #{unet_up_forward.1} parent=75 // pred_fallthru
        _
    $region76: #{unet_up_forward.1} parent=5 // pred_fallthru
      _
  $region6: #{unet_up_forward.1} parent=0 // loop_footer
    %s13 = sadd.s32 1, %s9
  $region7: #{unet_up_forward.1} parent=0 // loop_footer_branch
    %8 = sbr.rel target = $region3
  $region8: #{unet_up_forward.1} parent=0 // loop_exit
    _

</llo_original>
